<compile_context>
chip_gen: v7x
topology: tpu7x:2x2x1
jax: 0.10.0
libtpu: 0.0.40
codegen_flags: <defaults>
</compile_context>

<pallas_src>
import functools

import numpy as np
import jax
import jax.numpy as jnp
from jax import lax
from jax.experimental import pallas as pl
from jax.experimental.pallas import tpu as pltpu


# ------------------------ host-side constant builders ----------------------- #

def _interp_matrix_np(n_in, n_out):
    """Row-interpolation matrix for bilinear upsample, align_corners=True."""
    i = np.arange(n_out)
    src = i * (n_in - 1) / (n_out - 1) if n_out > 1 else np.zeros(1)
    i0 = np.floor(src).astype(np.int64)
    i1 = np.minimum(i0 + 1, n_in - 1)
    frac = (src - i0).astype(np.float32)
    U = np.zeros((n_out, n_in), np.float32)
    U[i, i0] += 1.0 - frac
    U[i, i1] += frac
    return U


def _upsample_pad_matrix(H1, W1, H2, W2):
    """(H1*W1, H2*W2) matrix folding bilinear x2 upsample + F.pad to (H2, W2)."""
    Hout, Wout = 2 * H1, 2 * W1
    Uh, Uw = _interp_matrix_np(H1, Hout), _interp_matrix_np(W1, Wout)
    py0, px0 = (H2 - Hout) // 2, (W2 - Wout) // 2
    Uh_eff = np.zeros((H2, H1), np.float32)
    Uw_eff = np.zeros((W2, W1), np.float32)
    for h2 in range(H2):
        s = h2 - py0
        if 0 <= s < Hout:
            Uh_eff[h2] = Uh[s]
    for w2 in range(W2):
        s = w2 - px0
        if 0 <= s < Wout:
            Uw_eff[w2] = Uw[s]
    K = np.einsum("ab,cd->bdac", Uh_eff, Uw_eff)          # (H1, W1, H2, W2)
    return jnp.asarray(K.reshape(H1 * W1, H2 * W2))


def _tap_masks(H, W, nb):
    """(9, nb*H*W) per-tap validity masks for a 3x3 'same' conv.

    The masks zero taps that fall outside the image (top/bottom/left/right
    borders), which also kills cross-image bleed at batch seams and at the
    wrap-around of the lane roll when `nb` images share the lane axis.
    """
    hw = np.arange(H * W)
    h, w = hw // W, hw % W
    m = np.zeros((9, H * W), np.float32)
    for ky in range(3):
        for kx in range(3):
            oy, ox = ky - 1, kx - 1
            ok = (h + oy >= 0) & (h + oy < H) & (w + ox >= 0) & (w + ox < W)
            m[ky * 3 + kx] = ok.astype(np.float32)
    return jnp.asarray(np.tile(m, (1, nb)))


# ----------------------------- Pallas kernel -------------------------------- #

def _up_doubleconv_kernel(x1_ref, x2_ref, kmat_ref, masks_ref,
                          w1_ref, w2_ref, t1_ref, t2_ref,
                          o_ref, col_ref, *, H, W, nb):
    HW = H * W
    L = nb * HW
    mdt = col_ref.dtype                 # MXU operand dtype (f32; bf16 on v6e/v7x)

    masks = masks_ref[...]              # (9, L) border + batch-seam validity

    def build_im2col(x, C):
        # Stacked im2col: 9 lane-rolled, masked copies of the (C, L) slab are
        # written tap-major into the VMEM scratch so the conv becomes ONE deep
        # contraction matmul instead of 9 depth-C matmuls.
        for ky in range(3):
            for kx in range(3):
                t = ky * 3 + kx
                delta = (ky - 1) * W + (kx - 1)       # flattened n*H*W shift
                # col[j] = x[j + delta]  (wraps are zeroed by the tap mask)
                col = x if delta == 0 else pltpu.roll(x, (-delta) % L, axis=1)
                if t != 4:                            # center tap needs no mask
                    col = col * masks[t:t + 1, :]
                col_ref[pl.ds(t * C, C), :] = col.astype(mdt)

    # 1) bilinear x2 upsample (align_corners=True) + F.pad as one matmul per
    #    image; images sit side by side along the lane axis (lane-dense).
    kmat = kmat_ref[...]
    ups = [jnp.dot(x1_ref[i].astype(mdt), kmat, preferred_element_type=jnp.float32)
           for i in range(nb)]
    x1u = ups[0] if nb == 1 else jnp.concatenate(ups, axis=1)       # (C1, L)

    # 2) conv1 over concat([x2, x1_up], channel): one (Cmid, 9*Cin) x (9*Cin, L)
    #    matmul; folded-BN shift + ReLU stay in f32 on the VPU.
    xin = jnp.concatenate([x2_ref[...], x1u], axis=0)               # (Cin, L)
    Cin = xin.shape[0]
    build_im2col(xin, Cin)
    y1 = jnp.dot(w1_ref[...], col_ref[pl.ds(0, 9 * Cin), :],
                 preferred_element_type=jnp.float32)
    y1 = jnp.maximum(y1 + t1_ref[...], 0.0)

    # 3) conv2: same stacked contraction; single lane-dense store.
    Cmid = y1.shape[0]
    build_im2col(y1, Cmid)
    y2 = jnp.dot(w2_ref[...], col_ref[pl.ds(0, 9 * Cmid), :],
                 preferred_element_type=jnp.float32)
    o_ref[...] = jnp.maximum(y2 + t2_ref[...], 0.0).astype(o_ref.dtype)


# ------------------------------- wrapper ------------------------------------ #

def up_forward(x1, x2, params, *, batch_block=None, mxu_dtype=jnp.float32):
    """Pallas equivalent of Up.forward(x1, x2): bilinear=True, BN eval mode.

    x1: (N, C1, H1, W1) low-res features; x2: (N, C2, H2, W2) skip connection.
    `batch_block` = images folded into the lane axis per grid step.
    `mxu_dtype`   = matmul operand dtype (jnp.bfloat16 recommended on v6e/v7x).
    """
    N, C1, H1, W1 = x1.shape
    N2, C2, H2, W2 = x2.shape
    assert N == N2
    HW, H1W1 = H2 * W2, H1 * W1
    Cmid, Cout = params["w1"].shape[0], params["w2"].shape[0]
    Cin = C2 + C1
    assert params["w1"].shape[1] == Cin

    # Images folded into lanes per step; keep >=2 grid steps when N >= 2 so
    # both v7x TensorCores get a "parallel" step each.
    if batch_block is None:
        nb = min(N, max(1, 4096 // HW))
        if N >= 2:
            nb = min(nb, max(1, N // 2))
    else:
        nb = min(int(batch_block), N)
    while N % nb:
        nb -= 1
    G = N // nb
    L = nb * HW

    kmat = _upsample_pad_matrix(H1, W1, H2, W2).astype(mxu_dtype)   # (H1W1, HW)
    masks = _tap_masks(H2, W2, nb)                                  # (9, L)

    # Fold BN scale into the conv weights and stack the 9 taps (channel-minor)
    # so each conv is one deep-contraction matmul.
    w1s = params["w1"] * params["s1"][:, None, None, None]
    w2s = params["w2"] * params["s2"][:, None, None, None]
    w1stack = jnp.transpose(w1s, (0, 2, 3, 1)).reshape(Cmid, 9 * Cin).astype(mxu_dtype)
    w2stack = jnp.transpose(w2s, (0, 2, 3, 1)).reshape(Cout, 9 * Cmid).astype(mxu_dtype)
    t1 = params["t1"].reshape(Cmid, 1).astype(jnp.float32)
    t2 = params["t2"].reshape(Cout, 1).astype(jnp.float32)

    # Wrapper-side layout plumbing: channels on sublanes, n*H*W on lanes.
    x1p = x1.reshape(N, C1, H1W1)                                    # (N, C1, H1W1)
    x2p = x2.reshape(N, C2, HW).transpose(1, 0, 2).reshape(C2, N * HW)

    kernel = functools.partial(_up_doubleconv_kernel, H=H2, W=W2, nb=nb)
    rows = 9 * max(Cin, Cmid)                                        # im2col scratch rows

    def build(const_mode):
        kw = {} if const_mode is None else dict(pipeline_mode=const_mode)

        def cspec(shp):
            return pl.BlockSpec(shp, lambda g, _s=shp: (0,) * len(_s), **kw)

        return pl.pallas_call(
            kernel,
            out_shape=jax.ShapeDtypeStruct((Cout, N * HW), jnp.float32),
            grid=(G,),
            in_specs=[
                pl.BlockSpec((nb, C1, H1W1), lambda g: (g, 0, 0)),   # x1 (per image)
                pl.BlockSpec((C2, L), lambda g: (0, g)),             # x2 (lane-folded)
                cspec((H1W1, HW)),                                   # upsample matrix
                cspec((9, L)),                                       # tap masks
                cspec((Cmid, 9 * Cin)),                              # conv1 stacked weights
                cspec((Cout, 9 * Cmid)),                             # conv2 stacked weights
                cspec((Cmid, 1)),                                    # conv1 BN shift
                cspec((Cout, 1)),                                    # conv2 BN shift
            ],
            out_specs=pl.BlockSpec((Cout, L), lambda g: (0, g)),
            scratch_shapes=[pltpu.VMEM((rows, L), mxu_dtype)],       # im2col stack
            compiler_params=pltpu.CompilerParams(
                dimension_semantics=("parallel",)),
        )(x1p, x2p, kmat, masks, w1stack, w2stack, t1, t2)

    try:
        # Grid-invariant operands are single-buffered (they never change
        # between steps); frees VMEM headroom, matters on v7x (64 MiB/TC).
        out = build(pl.Buffered(1))
    except Exception:
        # Installed JAX does not accept single-buffered pipeline_mode here;
        # fall back to default double buffering (constants are tiny anyway).
        out = build(None)

    return out.reshape(Cout, N, H2, W2).transpose(1, 0, 2, 3)


# --------------------------- pure-JAX reference ------------------------------ #

def ref_forward(x1, x2, raw):
    _, _, H1, W1 = x1.shape
    _, _, H2, W2 = x2.shape
    Uh = jnp.asarray(_interp_matrix_np(H1, 2 * H1))
    Uw = jnp.asarray(_interp_matrix_np(W1, 2 * W1))
    xu = jnp.einsum('ab,ncbw->ncaw', Uh, x1)
    xu = jnp.einsum('ab,nchb->ncha', Uw, xu)
    diffY, diffX = H2 - xu.shape[2], W2 - xu.shape[3]
    xu = jnp.pad(xu, ((0, 0), (0, 0),
                      (diffY // 2, diffY - diffY // 2),
                      (diffX // 2, diffX - diffX // 2)))
    x = jnp.concatenate([x2, xu], axis=1)

    def block(x, w, b, gamma, beta, mean, var):
        y = lax.conv_general_dilated(x, w, (1, 1), 'SAME',
                                     dimension_numbers=('NCHW', 'OIHW', 'NCHW'))
        y = y + b[None, :, None, None]
        y = (y - mean[None, :, None, None]) / jnp.sqrt(var[None, :, None, None] + 1e-5)
        y = y * gamma[None, :, None, None] + beta[None, :, None, None]
        return jnp.maximum(y, 0.0)

    y = block(x, raw["w1"], raw["b1"], raw["g1"], raw["be1"], raw["m1"], raw["v1"])
    y = block(y, raw["w2"], raw["b2"], raw["g2"], raw["be2"], raw["m2"], raw["v2"])
    return y


# ---------------------------------- main ------------------------------------- #

if __name__ == "__main__":
    # Up(in_channels=8, out_channels=4, bilinear=True): DoubleConv(8, 4, mid=4)
    Cin, Cout = 8, 4
    Cmid = Cin // 2
    key = jax.random.PRNGKey(0)
    ks = jax.random.split(key, 16)

    x1 = jax.random.normal(ks[0], (2, 4, 8, 8), jnp.float32)     # low-res feature
    x2 = jax.random.normal(ks[1], (2, 4, 16, 16), jnp.float32)   # skip connection

    raw = {
        "w1": jax.random.normal(ks[2], (Cmid, Cin, 3, 3), jnp.float32) * 0.1,
        "b1": jax.random.normal(ks[3], (Cmid,), jnp.float32) * 0.1,
        "g1": jax.random.normal(ks[4], (Cmid,), jnp.float32) * 0.1 + 1.0,
        "be1": jax.random.normal(ks[5], (Cmid,), jnp.float32) * 0.1,
        "m1": jax.random.normal(ks[6], (Cmid,), jnp.float32) * 0.1,
        "v1": jnp.abs(jax.random.normal(ks[7], (Cmid,), jnp.float32)) * 0.1 + 1.0,
        "w2": jax.random.normal(ks[8], (Cout, Cmid, 3, 3), jnp.float32) * 0.1,
        "b2": jax.random.normal(ks[9], (Cout,), jnp.float32) * 0.1,
        "g2": jax.random.normal(ks[10], (Cout,), jnp.float32) * 0.1 + 1.0,
        "be2": jax.random.normal(ks[11], (Cout,), jnp.float32) * 0.1,
        "m2": jax.random.normal(ks[12], (Cout,), jnp.float32) * 0.1,
        "v2": jnp.abs(jax.random.normal(ks[13], (Cout,), jnp.float32)) * 0.1 + 1.0,
    }

    # Fold conv bias + eval-mode BN into per-channel scale/shift.
    s1 = raw["g1"] / jnp.sqrt(raw["v1"] + 1e-5)
    t1 = (raw["b1"] - raw["m1"]) * s1 + raw["be1"]
    s2 = raw["g2"] / jnp.sqrt(raw["v2"] + 1e-5)
    t2 = (raw["b2"] - raw["m2"]) * s2 + raw["be2"]
    params = {"w1": raw["w1"], "s1": s1, "t1": t1,
              "w2": raw["w2"], "s2": s2, "t2": t2}

    ref = jax.block_until_ready(ref_forward(x1, x2, raw))

    # Default: 1 image / grid step (keeps >=2 parallel steps for v7x's 2 TCs).
    out = jax.block_until_ready(up_forward(x1, x2, params))
    assert out.shape == (2, Cout, 16, 16), out.shape
    np.testing.assert_allclose(np.asarray(out), np.asarray(ref), rtol=1e-2, atol=1e-3)

    # Batch fully folded into the lane axis: one grid step, (C, N*H*W) slabs.
    out_folded = jax.block_until_ready(up_forward(x1, x2, params, batch_block=2))
    np.testing.assert_allclose(np.asarray(out_folded), np.asarray(ref),
                               rtol=1e-2, atol=1e-3)

    print("KERNEL_OK")
</pallas_src>

<mosaic_0001>
module attributes {stable_mosaic.version = 11 : i64} {
  func.func @_up_doubleconv_kernel(%arg0: i32, %arg1: memref<1x4x64xf32, #tpu.memory_space<vmem>>, %arg2: memref<4x256xf32, #tpu.memory_space<vmem>>, %arg3: memref<64x256xf32, #tpu.memory_space<vmem>>, %arg4: memref<9x256xf32, #tpu.memory_space<vmem>>, %arg5: memref<4x72xf32, #tpu.memory_space<vmem>>, %arg6: memref<4x36xf32, #tpu.memory_space<vmem>>, %arg7: memref<4x1xf32, #tpu.memory_space<vmem>>, %arg8: memref<4x1xf32, #tpu.memory_space<vmem>>, %arg9: memref<4x256xf32, #tpu.memory_space<vmem>>, %arg10: memref<72x256xf32, #tpu.memory_space<vmem>>) attributes {dimension_semantics = [#tpu.dimension_semantics<parallel>], iteration_bounds = array<i64: 2>, scalar_prefetch = 0 : i64, scratch_operands = 1 : i64, tpu.core_type = #tpu.core_type<tc>, window_params = [{transform_indices = @transform_0, window_bounds = array<i64: 1, 4, 64>}, {transform_indices = @transform_1, window_bounds = array<i64: 4, 256>}, {pipeline_mode = #tpu.pipeline_mode<synchronous>, transform_indices = @transform_2, window_bounds = array<i64: 64, 256>}, {pipeline_mode = #tpu.pipeline_mode<synchronous>, transform_indices = @transform_3, window_bounds = array<i64: 9, 256>}, {pipeline_mode = #tpu.pipeline_mode<synchronous>, transform_indices = @transform_4, window_bounds = array<i64: 4, 72>}, {pipeline_mode = #tpu.pipeline_mode<synchronous>, transform_indices = @transform_5, window_bounds = array<i64: 4, 36>}, {pipeline_mode = #tpu.pipeline_mode<synchronous>, transform_indices = @transform_6, window_bounds = array<i64: 4, 1>}, {pipeline_mode = #tpu.pipeline_mode<synchronous>, transform_indices = @transform_7, window_bounds = array<i64: 4, 1>}, {transform_indices = @transform_8, window_bounds = array<i64: 4, 256>}]} {
    %c0 = arith.constant 0 : index
    %c0_0 = arith.constant 0 : index
    %0 = vector.load %arg4[%c0, %c0_0] : memref<9x256xf32, #tpu.memory_space<vmem>>, vector<9x256xf32>
    %c0_1 = arith.constant 0 : index
    %c0_2 = arith.constant 0 : index
    %1 = vector.load %arg3[%c0_1, %c0_2] : memref<64x256xf32, #tpu.memory_space<vmem>>, vector<64x256xf32>
    %c0_3 = arith.constant 0 : index
    %c0_4 = arith.constant 0 : index
    %c0_5 = arith.constant 0 : index
    %2 = vector.load %arg1[%c0_3, %c0_4, %c0_5] : memref<1x4x64xf32, #tpu.memory_space<vmem>>, vector<1x4x64xf32>
    %3 = vector.shape_cast %2 : vector<1x4x64xf32> to vector<4x64xf32>
    %cst = arith.constant dense<0.000000e+00> : vector<4x256xf32>
    %4 = tpu.matmul %3, %1, %cst {dimension_numbers = #tpu.dot_dimension_numbers<[1], [0], [0], [1], [0, 0, 1, 1], [], []>} : vector<4x64xf32>, vector<64x256xf32>, vector<4x256xf32> -> vector<4x256xf32>
    %c0_6 = arith.constant 0 : index
    %c0_7 = arith.constant 0 : index
    %5 = vector.load %arg2[%c0_6, %c0_7] : memref<4x256xf32, #tpu.memory_space<vmem>>, vector<4x256xf32>
    %6 = tpu.concatenate %5, %4 in 0 : vector<4x256xf32>, vector<4x256xf32> -> vector<8x256xf32>
    %c17_i32 = arith.constant 17 : i32
    %7 = tpu.dynamic_rotate %6 by %c17_i32 dim 1 : vector<8x256xf32>, i32 -> vector<8x256xf32>
    %8 = vector.extract_strided_slice %0 {offsets = [0, 0], sizes = [1, 256], strides = [1, 1]} : vector<9x256xf32> to vector<1x256xf32>
    %9 = vector.broadcast %8 : vector<1x256xf32> to vector<8x256xf32>
    %10 = arith.mulf %7, %9 : vector<8x256xf32>
    %c0_8 = arith.constant 0 : index
    %c0_9 = arith.constant 0 : index
    %11 = vector.load %arg10[%c0_8, %c0_9] : memref<72x256xf32, #tpu.memory_space<vmem>>, vector<8x256xf32>
    tpu.vector_store %arg10[%c0_8, %c0_9], %10 {strides = array<i32>} : memref<72x256xf32, #tpu.memory_space<vmem>>, vector<8x256xf32>,
    %c16_i32 = arith.constant 16 : i32
    %12 = tpu.dynamic_rotate %6 by %c16_i32 dim 1 : vector<8x256xf32>, i32 -> vector<8x256xf32>
    %13 = vector.extract_strided_slice %0 {offsets = [1, 0], sizes = [1, 256], strides = [1, 1]} : vector<9x256xf32> to vector<1x256xf32>
    %14 = vector.broadcast %13 : vector<1x256xf32> to vector<8x256xf32>
    %15 = arith.mulf %12, %14 : vector<8x256xf32>
    %c8 = arith.constant 8 : index
    %c0_10 = arith.constant 0 : index
    %16 = vector.load %arg10[%c8, %c0_10] : memref<72x256xf32, #tpu.memory_space<vmem>>, vector<8x256xf32>
    tpu.vector_store %arg10[%c8, %c0_10], %15 {strides = array<i32>} : memref<72x256xf32, #tpu.memory_space<vmem>>, vector<8x256xf32>,
    %c15_i32 = arith.constant 15 : i32
    %17 = tpu.dynamic_rotate %6 by %c15_i32 dim 1 : vector<8x256xf32>, i32 -> vector<8x256xf32>
    %18 = vector.extract_strided_slice %0 {offsets = [2, 0], sizes = [1, 256], strides = [1, 1]} : vector<9x256xf32> to vector<1x256xf32>
    %19 = vector.broadcast %18 : vector<1x256xf32> to vector<8x256xf32>
    %20 = arith.mulf %17, %19 : vector<8x256xf32>
    %c16 = arith.constant 16 : index
    %c0_11 = arith.constant 0 : index
    %21 = vector.load %arg10[%c16, %c0_11] : memref<72x256xf32, #tpu.memory_space<vmem>>, vector<8x256xf32>
    tpu.vector_store %arg10[%c16, %c0_11], %20 {strides = array<i32>} : memref<72x256xf32, #tpu.memory_space<vmem>>, vector<8x256xf32>,
    %c1_i32 = arith.constant 1 : i32
    %22 = tpu.dynamic_rotate %6 by %c1_i32 dim 1 : vector<8x256xf32>, i32 -> vector<8x256xf32>
    %23 = vector.extract_strided_slice %0 {offsets = [3, 0], sizes = [1, 256], strides = [1, 1]} : vector<9x256xf32> to vector<1x256xf32>
    %24 = vector.broadcast %23 : vector<1x256xf32> to vector<8x256xf32>
    %25 = arith.mulf %22, %24 : vector<8x256xf32>
    %c24 = arith.constant 24 : index
    %c0_12 = arith.constant 0 : index
    %26 = vector.load %arg10[%c24, %c0_12] : memref<72x256xf32, #tpu.memory_space<vmem>>, vector<8x256xf32>
    tpu.vector_store %arg10[%c24, %c0_12], %25 {strides = array<i32>} : memref<72x256xf32, #tpu.memory_space<vmem>>, vector<8x256xf32>,
    %c32 = arith.constant 32 : index
    %c0_13 = arith.constant 0 : index
    %27 = vector.load %arg10[%c32, %c0_13] : memref<72x256xf32, #tpu.memory_space<vmem>>, vector<8x256xf32>
    tpu.vector_store %arg10[%c32, %c0_13], %6 {strides = array<i32>} : memref<72x256xf32, #tpu.memory_space<vmem>>, vector<8x256xf32>,
    %c255_i32 = arith.constant 255 : i32
    %28 = tpu.dynamic_rotate %6 by %c255_i32 dim 1 : vector<8x256xf32>, i32 -> vector<8x256xf32>
    %29 = vector.extract_strided_slice %0 {offsets = [5, 0], sizes = [1, 256], strides = [1, 1]} : vector<9x256xf32> to vector<1x256xf32>
    %30 = vector.broadcast %29 : vector<1x256xf32> to vector<8x256xf32>
    %31 = arith.mulf %28, %30 : vector<8x256xf32>
    %c40 = arith.constant 40 : index
    %c0_14 = arith.constant 0 : index
    %32 = vector.load %arg10[%c40, %c0_14] : memref<72x256xf32, #tpu.memory_space<vmem>>, vector<8x256xf32>
    tpu.vector_store %arg10[%c40, %c0_14], %31 {strides = array<i32>} : memref<72x256xf32, #tpu.memory_space<vmem>>, vector<8x256xf32>,
    %c241_i32 = arith.constant 241 : i32
    %33 = tpu.dynamic_rotate %6 by %c241_i32 dim 1 : vector<8x256xf32>, i32 -> vector<8x256xf32>
    %34 = vector.extract_strided_slice %0 {offsets = [6, 0], sizes = [1, 256], strides = [1, 1]} : vector<9x256xf32> to vector<1x256xf32>
    %35 = vector.broadcast %34 : vector<1x256xf32> to vector<8x256xf32>
    %36 = arith.mulf %33, %35 : vector<8x256xf32>
    %c48 = arith.constant 48 : index
    %c0_15 = arith.constant 0 : index
    %37 = vector.load %arg10[%c48, %c0_15] : memref<72x256xf32, #tpu.memory_space<vmem>>, vector<8x256xf32>
    tpu.vector_store %arg10[%c48, %c0_15], %36 {strides = array<i32>} : memref<72x256xf32, #tpu.memory_space<vmem>>, vector<8x256xf32>,
    %c240_i32 = arith.constant 240 : i32
    %38 = tpu.dynamic_rotate %6 by %c240_i32 dim 1 : vector<8x256xf32>, i32 -> vector<8x256xf32>
    %39 = vector.extract_strided_slice %0 {offsets = [7, 0], sizes = [1, 256], strides = [1, 1]} : vector<9x256xf32> to vector<1x256xf32>
    %40 = vector.broadcast %39 : vector<1x256xf32> to vector<8x256xf32>
    %41 = arith.mulf %38, %40 : vector<8x256xf32>
    %c56 = arith.constant 56 : index
    %c0_16 = arith.constant 0 : index
    %42 = vector.load %arg10[%c56, %c0_16] : memref<72x256xf32, #tpu.memory_space<vmem>>, vector<8x256xf32>
    tpu.vector_store %arg10[%c56, %c0_16], %41 {strides = array<i32>} : memref<72x256xf32, #tpu.memory_space<vmem>>, vector<8x256xf32>,
    %c239_i32 = arith.constant 239 : i32
    %43 = tpu.dynamic_rotate %6 by %c239_i32 dim 1 : vector<8x256xf32>, i32 -> vector<8x256xf32>
    %44 = vector.extract_strided_slice %0 {offsets = [8, 0], sizes = [1, 256], strides = [1, 1]} : vector<9x256xf32> to vector<1x256xf32>
    %45 = vector.broadcast %44 : vector<1x256xf32> to vector<8x256xf32>
    %46 = arith.mulf %43, %45 : vector<8x256xf32>
    %c64 = arith.constant 64 : index
    %c0_17 = arith.constant 0 : index
    %47 = vector.load %arg10[%c64, %c0_17] : memref<72x256xf32, #tpu.memory_space<vmem>>, vector<8x256xf32>
    tpu.vector_store %arg10[%c64, %c0_17], %46 {strides = array<i32>} : memref<72x256xf32, #tpu.memory_space<vmem>>, vector<8x256xf32>,
    %c0_18 = arith.constant 0 : index
    %c0_19 = arith.constant 0 : index
    %48 = vector.load %arg5[%c0_18, %c0_19] : memref<4x72xf32, #tpu.memory_space<vmem>>, vector<4x72xf32>
    %c0_20 = arith.constant 0 : index
    %c0_21 = arith.constant 0 : index
    %49 = vector.load %arg10[%c0_20, %c0_21] : memref<72x256xf32, #tpu.memory_space<vmem>>, vector<72x256xf32>
    %cst_22 = arith.constant dense<0.000000e+00> : vector<4x256xf32>
    %50 = tpu.matmul %48, %49, %cst_22 {dimension_numbers = #tpu.dot_dimension_numbers<[1], [0], [0], [1], [0, 0, 1, 1], [], []>} : vector<4x72xf32>, vector<72x256xf32>, vector<4x256xf32> -> vector<4x256xf32>
    %c0_23 = arith.constant 0 : index
    %c0_24 = arith.constant 0 : index
    %51 = vector.load %arg7[%c0_23, %c0_24] : memref<4x1xf32, #tpu.memory_space<vmem>>, vector<4x1xf32>
    %52 = vector.broadcast %51 : vector<4x1xf32> to vector<4x256xf32>
    %53 = arith.addf %50, %52 : vector<4x256xf32>
    %cst_25 = arith.constant 0.000000e+00 : f32
    %54 = vector.broadcast %cst_25 : f32 to vector<4x256xf32>
    %55 = arith.maximumf %53, %54 : vector<4x256xf32>
    %c17_i32_26 = arith.constant 17 : i32
    %56 = tpu.dynamic_rotate %55 by %c17_i32_26 dim 1 : vector<4x256xf32>, i32 -> vector<4x256xf32>
    %57 = vector.extract_strided_slice %0 {offsets = [0, 0], sizes = [1, 256], strides = [1, 1]} : vector<9x256xf32> to vector<1x256xf32>
    %58 = vector.broadcast %57 : vector<1x256xf32> to vector<4x256xf32>
    %59 = arith.mulf %56, %58 : vector<4x256xf32>
    %c0_27 = arith.constant 0 : index
    %c0_28 = arith.constant 0 : index
    %60 = vector.load %arg10[%c0_27, %c0_28] : memref<72x256xf32, #tpu.memory_space<vmem>>, vector<4x256xf32>
    tpu.vector_store %arg10[%c0_27, %c0_28], %59 {strides = array<i32>} : memref<72x256xf32, #tpu.memory_space<vmem>>, vector<4x256xf32>,
    %c16_i32_29 = arith.constant 16 : i32
    %61 = tpu.dynamic_rotate %55 by %c16_i32_29 dim 1 : vector<4x256xf32>, i32 -> vector<4x256xf32>
    %62 = vector.extract_strided_slice %0 {offsets = [1, 0], sizes = [1, 256], strides = [1, 1]} : vector<9x256xf32> to vector<1x256xf32>
    %63 = vector.broadcast %62 : vector<1x256xf32> to vector<4x256xf32>
    %64 = arith.mulf %61, %63 : vector<4x256xf32>
    %c4 = arith.constant 4 : index
    %c0_30 = arith.constant 0 : index
    %65 = vector.load %arg10[%c4, %c0_30] : memref<72x256xf32, #tpu.memory_space<vmem>>, vector<4x256xf32>
    tpu.vector_store %arg10[%c4, %c0_30], %64 {strides = array<i32>} : memref<72x256xf32, #tpu.memory_space<vmem>>, vector<4x256xf32>,
    %c15_i32_31 = arith.constant 15 : i32
    %66 = tpu.dynamic_rotate %55 by %c15_i32_31 dim 1 : vector<4x256xf32>, i32 -> vector<4x256xf32>
    %67 = vector.extract_strided_slice %0 {offsets = [2, 0], sizes = [1, 256], strides = [1, 1]} : vector<9x256xf32> to vector<1x256xf32>
    %68 = vector.broadcast %67 : vector<1x256xf32> to vector<4x256xf32>
    %69 = arith.mulf %66, %68 : vector<4x256xf32>
    %c8_32 = arith.constant 8 : index
    %c0_33 = arith.constant 0 : index
    %70 = vector.load %arg10[%c8_32, %c0_33] : memref<72x256xf32, #tpu.memory_space<vmem>>, vector<4x256xf32>
    tpu.vector_store %arg10[%c8_32, %c0_33], %69 {strides = array<i32>} : memref<72x256xf32, #tpu.memory_space<vmem>>, vector<4x256xf32>,
    %c1_i32_34 = arith.constant 1 : i32
    %71 = tpu.dynamic_rotate %55 by %c1_i32_34 dim 1 : vector<4x256xf32>, i32 -> vector<4x256xf32>
    %72 = vector.extract_strided_slice %0 {offsets = [3, 0], sizes = [1, 256], strides = [1, 1]} : vector<9x256xf32> to vector<1x256xf32>
    %73 = vector.broadcast %72 : vector<1x256xf32> to vector<4x256xf32>
    %74 = arith.mulf %71, %73 : vector<4x256xf32>
    %c12 = arith.constant 12 : index
    %c0_35 = arith.constant 0 : index
    %75 = vector.load %arg10[%c12, %c0_35] : memref<72x256xf32, #tpu.memory_space<vmem>>, vector<4x256xf32>
    tpu.vector_store %arg10[%c12, %c0_35], %74 {strides = array<i32>} : memref<72x256xf32, #tpu.memory_space<vmem>>, vector<4x256xf32>,
    %c16_36 = arith.constant 16 : index
    %c0_37 = arith.constant 0 : index
    %76 = vector.load %arg10[%c16_36, %c0_37] : memref<72x256xf32, #tpu.memory_space<vmem>>, vector<4x256xf32>
    tpu.vector_store %arg10[%c16_36, %c0_37], %55 {strides = array<i32>} : memref<72x256xf32, #tpu.memory_space<vmem>>, vector<4x256xf32>,
    %c255_i32_38 = arith.constant 255 : i32
    %77 = tpu.dynamic_rotate %55 by %c255_i32_38 dim 1 : vector<4x256xf32>, i32 -> vector<4x256xf32>
    %78 = vector.extract_strided_slice %0 {offsets = [5, 0], sizes = [1, 256], strides = [1, 1]} : vector<9x256xf32> to vector<1x256xf32>
    %79 = vector.broadcast %78 : vector<1x256xf32> to vector<4x256xf32>
    %80 = arith.mulf %77, %79 : vector<4x256xf32>
    %c20 = arith.constant 20 : index
    %c0_39 = arith.constant 0 : index
    %81 = vector.load %arg10[%c20, %c0_39] : memref<72x256xf32, #tpu.memory_space<vmem>>, vector<4x256xf32>
    tpu.vector_store %arg10[%c20, %c0_39], %80 {strides = array<i32>} : memref<72x256xf32, #tpu.memory_space<vmem>>, vector<4x256xf32>,
    %c241_i32_40 = arith.constant 241 : i32
    %82 = tpu.dynamic_rotate %55 by %c241_i32_40 dim 1 : vector<4x256xf32>, i32 -> vector<4x256xf32>
    %83 = vector.extract_strided_slice %0 {offsets = [6, 0], sizes = [1, 256], strides = [1, 1]} : vector<9x256xf32> to vector<1x256xf32>
    %84 = vector.broadcast %83 : vector<1x256xf32> to vector<4x256xf32>
    %85 = arith.mulf %82, %84 : vector<4x256xf32>
    %c24_41 = arith.constant 24 : index
    %c0_42 = arith.constant 0 : index
    %86 = vector.load %arg10[%c24_41, %c0_42] : memref<72x256xf32, #tpu.memory_space<vmem>>, vector<4x256xf32>
    tpu.vector_store %arg10[%c24_41, %c0_42], %85 {strides = array<i32>} : memref<72x256xf32, #tpu.memory_space<vmem>>, vector<4x256xf32>,
    %c240_i32_43 = arith.constant 240 : i32
    %87 = tpu.dynamic_rotate %55 by %c240_i32_43 dim 1 : vector<4x256xf32>, i32 -> vector<4x256xf32>
    %88 = vector.extract_strided_slice %0 {offsets = [7, 0], sizes = [1, 256], strides = [1, 1]} : vector<9x256xf32> to vector<1x256xf32>
    %89 = vector.broadcast %88 : vector<1x256xf32> to vector<4x256xf32>
    %90 = arith.mulf %87, %89 : vector<4x256xf32>
    %c28 = arith.constant 28 : index
    %c0_44 = arith.constant 0 : index
    %91 = vector.load %arg10[%c28, %c0_44] : memref<72x256xf32, #tpu.memory_space<vmem>>, vector<4x256xf32>
    tpu.vector_store %arg10[%c28, %c0_44], %90 {strides = array<i32>} : memref<72x256xf32, #tpu.memory_space<vmem>>, vector<4x256xf32>,
    %c239_i32_45 = arith.constant 239 : i32
    %92 = tpu.dynamic_rotate %55 by %c239_i32_45 dim 1 : vector<4x256xf32>, i32 -> vector<4x256xf32>
    %93 = vector.extract_strided_slice %0 {offsets = [8, 0], sizes = [1, 256], strides = [1, 1]} : vector<9x256xf32> to vector<1x256xf32>
    %94 = vector.broadcast %93 : vector<1x256xf32> to vector<4x256xf32>
    %95 = arith.mulf %92, %94 : vector<4x256xf32>
    %c32_46 = arith.constant 32 : index
    %c0_47 = arith.constant 0 : index
    %96 = vector.load %arg10[%c32_46, %c0_47] : memref<72x256xf32, #tpu.memory_space<vmem>>, vector<4x256xf32>
    tpu.vector_store %arg10[%c32_46, %c0_47], %95 {strides = array<i32>} : memref<72x256xf32, #tpu.memory_space<vmem>>, vector<4x256xf32>,
    %c0_48 = arith.constant 0 : index
    %c0_49 = arith.constant 0 : index
    %97 = vector.load %arg6[%c0_48, %c0_49] : memref<4x36xf32, #tpu.memory_space<vmem>>, vector<4x36xf32>
    %c0_50 = arith.constant 0 : index
    %c0_51 = arith.constant 0 : index
    %98 = vector.load %arg10[%c0_50, %c0_51] : memref<72x256xf32, #tpu.memory_space<vmem>>, vector<36x256xf32>
    %cst_52 = arith.constant dense<0.000000e+00> : vector<4x256xf32>
    %99 = tpu.matmul %97, %98, %cst_52 {dimension_numbers = #tpu.dot_dimension_numbers<[1], [0], [0], [1], [0, 0, 1, 1], [], []>} : vector<4x36xf32>, vector<36x256xf32>, vector<4x256xf32> -> vector<4x256xf32>
    %c0_53 = arith.constant 0 : index
    %c0_54 = arith.constant 0 : index
    %100 = vector.load %arg8[%c0_53, %c0_54] : memref<4x1xf32, #tpu.memory_space<vmem>>, vector<4x1xf32>
    %101 = vector.broadcast %100 : vector<4x1xf32> to vector<4x256xf32>
    %102 = arith.addf %99, %101 : vector<4x256xf32>
    %cst_55 = arith.constant 0.000000e+00 : f32
    %103 = vector.broadcast %cst_55 : f32 to vector<4x256xf32>
    %104 = arith.maximumf %102, %103 : vector<4x256xf32>
    %c0_56 = arith.constant 0 : index
    %c0_57 = arith.constant 0 : index
    %105 = vector.load %arg9[%c0_56, %c0_57] : memref<4x256xf32, #tpu.memory_space<vmem>>, vector<4x256xf32>
    tpu.vector_store %arg9[%c0_56, %c0_57], %104 {strides = array<i32>} : memref<4x256xf32, #tpu.memory_space<vmem>>, vector<4x256xf32>,
    return
  }
  func.func @transform_0(%arg0: i32) -> (i32, i32, i32) {
    %c0_i32 = arith.constant 0 : i32
    %c0_i32_0 = arith.constant 0 : i32
    %c0_i32_1 = arith.constant 0 : i32
    return %arg0, %c0_i32, %c0_i32_0 : i32, i32, i32
  }
  func.func @transform_1(%arg0: i32) -> (i32, i32) {
    %c0_i32 = arith.constant 0 : i32
    %c0_i32_0 = arith.constant 0 : i32
    return %c0_i32, %arg0 : i32, i32
  }
  func.func @transform_2(%arg0: i32) -> (i32, i32) {
    %c0_i32 = arith.constant 0 : i32
    %c0_i32_0 = arith.constant 0 : i32
    %c0_i32_1 = arith.constant 0 : i32
    return %c0_i32, %c0_i32_0 : i32, i32
  }
  func.func @transform_3(%arg0: i32) -> (i32, i32) {
    %c0_i32 = arith.constant 0 : i32
    %c0_i32_0 = arith.constant 0 : i32
    %c0_i32_1 = arith.constant 0 : i32
    return %c0_i32, %c0_i32_0 : i32, i32
  }
  func.func @transform_4(%arg0: i32) -> (i32, i32) {
    %c0_i32 = arith.constant 0 : i32
    %c0_i32_0 = arith.constant 0 : i32
    %c0_i32_1 = arith.constant 0 : i32
    return %c0_i32, %c0_i32_0 : i32, i32
  }
  func.func @transform_5(%arg0: i32) -> (i32, i32) {
    %c0_i32 = arith.constant 0 : i32
    %c0_i32_0 = arith.constant 0 : i32
    %c0_i32_1 = arith.constant 0 : i32
    return %c0_i32, %c0_i32_0 : i32, i32
  }
  func.func @transform_6(%arg0: i32) -> (i32, i32) {
    %c0_i32 = arith.constant 0 : i32
    %c0_i32_0 = arith.constant 0 : i32
    %c0_i32_1 = arith.constant 0 : i32
    return %c0_i32, %c0_i32_0 : i32, i32
  }
  func.func @transform_7(%arg0: i32) -> (i32, i32) {
    %c0_i32 = arith.constant 0 : i32
    %c0_i32_0 = arith.constant 0 : i32
    %c0_i32_1 = arith.constant 0 : i32
    return %c0_i32, %c0_i32_0 : i32, i32
  }
  func.func @transform_8(%arg0: i32) -> (i32, i32) {
    %c0_i32 = arith.constant 0 : i32
    %c0_i32_0 = arith.constant 0 : i32
    return %c0_i32, %arg0 : i32, i32
  }
}

module attributes {stable_mosaic.version = 11 : i64} {
  func.func @_up_doubleconv_kernel(%arg0: i32, %arg1: memref<1x4x64xf32, #tpu.memory_space<vmem>>, %arg2: memref<4x256xf32, #tpu.memory_space<vmem>>, %arg3: memref<64x256xf32, #tpu.memory_space<vmem>>, %arg4: memref<9x256xf32, #tpu.memory_space<vmem>>, %arg5: memref<4x72xf32, #tpu.memory_space<vmem>>, %arg6: memref<4x36xf32, #tpu.memory_space<vmem>>, %arg7: memref<4x1xf32, #tpu.memory_space<vmem>>, %arg8: memref<4x1xf32, #tpu.memory_space<vmem>>, %arg9: memref<4x256xf32, #tpu.memory_space<vmem>>, %arg10: memref<72x256xf32, #tpu.memory_space<vmem>>) attributes {dimension_semantics = [#tpu.dimension_semantics<parallel>], iteration_bounds = array<i64: 2>, scalar_prefetch = 0 : i64, scratch_operands = 1 : i64, tpu.core_type = #tpu.core_type<tc>, window_params = [{transform_indices = @transform_0, window_bounds = array<i64: 1, 4, 64>}, {transform_indices = @transform_1, window_bounds = array<i64: 4, 256>}, {pipeline_mode = #tpu.pipeline_mode<synchronous>, transform_indices = @transform_2, window_bounds = array<i64: 64, 256>}, {pipeline_mode = #tpu.pipeline_mode<synchronous>, transform_indices = @transform_3, window_bounds = array<i64: 9, 256>}, {pipeline_mode = #tpu.pipeline_mode<synchronous>, transform_indices = @transform_4, window_bounds = array<i64: 4, 72>}, {pipeline_mode = #tpu.pipeline_mode<synchronous>, transform_indices = @transform_5, window_bounds = array<i64: 4, 36>}, {pipeline_mode = #tpu.pipeline_mode<synchronous>, transform_indices = @transform_6, window_bounds = array<i64: 4, 1>}, {pipeline_mode = #tpu.pipeline_mode<synchronous>, transform_indices = @transform_7, window_bounds = array<i64: 4, 1>}, {transform_indices = @transform_8, window_bounds = array<i64: 4, 256>}]} {
    %c0 = arith.constant 0 : index
    %c0_0 = arith.constant 0 : index
    %0 = vector.load %arg4[%c0, %c0_0] : memref<9x256xf32, #tpu.memory_space<vmem>>, vector<9x256xf32>
    %c0_1 = arith.constant 0 : index
    %c0_2 = arith.constant 0 : index
    %1 = vector.load %arg3[%c0_1, %c0_2] : memref<64x256xf32, #tpu.memory_space<vmem>>, vector<64x256xf32>
    %c0_3 = arith.constant 0 : index
    %c0_4 = arith.constant 0 : index
    %c0_5 = arith.constant 0 : index
    %2 = vector.load %arg1[%c0_3, %c0_4, %c0_5] : memref<1x4x64xf32, #tpu.memory_space<vmem>>, vector<1x4x64xf32>
    %3 = vector.shape_cast %2 : vector<1x4x64xf32> to vector<4x64xf32>
    %cst = arith.constant dense<0.000000e+00> : vector<4x256xf32>
    %4 = tpu.matmul %3, %1, %cst {dimension_numbers = #tpu.dot_dimension_numbers<[1], [0], [0], [1], [0, 0, 1, 1], [], []>} : vector<4x64xf32>, vector<64x256xf32>, vector<4x256xf32> -> vector<4x256xf32>
    %c0_6 = arith.constant 0 : index
    %c0_7 = arith.constant 0 : index
    %5 = vector.load %arg2[%c0_6, %c0_7] : memref<4x256xf32, #tpu.memory_space<vmem>>, vector<4x256xf32>
    %6 = tpu.concatenate %5, %4 in 0 : vector<4x256xf32>, vector<4x256xf32> -> vector<8x256xf32>
    %c17_i32 = arith.constant 17 : i32
    %7 = tpu.dynamic_rotate %6 by %c17_i32 dim 1 : vector<8x256xf32>, i32 -> vector<8x256xf32>
    %8 = vector.extract_strided_slice %0 {offsets = [0, 0], sizes = [1, 256], strides = [1, 1]} : vector<9x256xf32> to vector<1x256xf32>
    %9 = vector.broadcast %8 : vector<1x256xf32> to vector<8x256xf32>
    %10 = arith.mulf %7, %9 : vector<8x256xf32>
    %c0_8 = arith.constant 0 : index
    %c0_9 = arith.constant 0 : index
    %11 = vector.load %arg10[%c0_8, %c0_9] : memref<72x256xf32, #tpu.memory_space<vmem>>, vector<8x256xf32>
    tpu.vector_store %arg10[%c0_8, %c0_9], %10 {strides = array<i32>} : memref<72x256xf32, #tpu.memory_space<vmem>>, vector<8x256xf32>,
    %c16_i32 = arith.constant 16 : i32
    %12 = tpu.dynamic_rotate %6 by %c16_i32 dim 1 : vector<8x256xf32>, i32 -> vector<8x256xf32>
    %13 = vector.extract_strided_slice %0 {offsets = [1, 0], sizes = [1, 256], strides = [1, 1]} : vector<9x256xf32> to vector<1x256xf32>
    %14 = vector.broadcast %13 : vector<1x256xf32> to vector<8x256xf32>
    %15 = arith.mulf %12, %14 : vector<8x256xf32>
    %c8 = arith.constant 8 : index
    %c0_10 = arith.constant 0 : index
    %16 = vector.load %arg10[%c8, %c0_10] : memref<72x256xf32, #tpu.memory_space<vmem>>, vector<8x256xf32>
    tpu.vector_store %arg10[%c8, %c0_10], %15 {strides = array<i32>} : memref<72x256xf32, #tpu.memory_space<vmem>>, vector<8x256xf32>,
    %c15_i32 = arith.constant 15 : i32
    %17 = tpu.dynamic_rotate %6 by %c15_i32 dim 1 : vector<8x256xf32>, i32 -> vector<8x256xf32>
    %18 = vector.extract_strided_slice %0 {offsets = [2, 0], sizes = [1, 256], strides = [1, 1]} : vector<9x256xf32> to vector<1x256xf32>
    %19 = vector.broadcast %18 : vector<1x256xf32> to vector<8x256xf32>
    %20 = arith.mulf %17, %19 : vector<8x256xf32>
    %c16 = arith.constant 16 : index
    %c0_11 = arith.constant 0 : index
    %21 = vector.load %arg10[%c16, %c0_11] : memref<72x256xf32, #tpu.memory_space<vmem>>, vector<8x256xf32>
    tpu.vector_store %arg10[%c16, %c0_11], %20 {strides = array<i32>} : memref<72x256xf32, #tpu.memory_space<vmem>>, vector<8x256xf32>,
    %c1_i32 = arith.constant 1 : i32
    %22 = tpu.dynamic_rotate %6 by %c1_i32 dim 1 : vector<8x256xf32>, i32 -> vector<8x256xf32>
    %23 = vector.extract_strided_slice %0 {offsets = [3, 0], sizes = [1, 256], strides = [1, 1]} : vector<9x256xf32> to vector<1x256xf32>
    %24 = vector.broadcast %23 : vector<1x256xf32> to vector<8x256xf32>
    %25 = arith.mulf %22, %24 : vector<8x256xf32>
    %c24 = arith.constant 24 : index
    %c0_12 = arith.constant 0 : index
    %26 = vector.load %arg10[%c24, %c0_12] : memref<72x256xf32, #tpu.memory_space<vmem>>, vector<8x256xf32>
    tpu.vector_store %arg10[%c24, %c0_12], %25 {strides = array<i32>} : memref<72x256xf32, #tpu.memory_space<vmem>>, vector<8x256xf32>,
    %c32 = arith.constant 32 : index
    %c0_13 = arith.constant 0 : index
    %27 = vector.load %arg10[%c32, %c0_13] : memref<72x256xf32, #tpu.memory_space<vmem>>, vector<8x256xf32>
    tpu.vector_store %arg10[%c32, %c0_13], %6 {strides = array<i32>} : memref<72x256xf32, #tpu.memory_space<vmem>>, vector<8x256xf32>,
    %c255_i32 = arith.constant 255 : i32
    %28 = tpu.dynamic_rotate %6 by %c255_i32 dim 1 : vector<8x256xf32>, i32 -> vector<8x256xf32>
    %29 = vector.extract_strided_slice %0 {offsets = [5, 0], sizes = [1, 256], strides = [1, 1]} : vector<9x256xf32> to vector<1x256xf32>
    %30 = vector.broadcast %29 : vector<1x256xf32> to vector<8x256xf32>
    %31 = arith.mulf %28, %30 : vector<8x256xf32>
    %c40 = arith.constant 40 : index
    %c0_14 = arith.constant 0 : index
    %32 = vector.load %arg10[%c40, %c0_14] : memref<72x256xf32, #tpu.memory_space<vmem>>, vector<8x256xf32>
    tpu.vector_store %arg10[%c40, %c0_14], %31 {strides = array<i32>} : memref<72x256xf32, #tpu.memory_space<vmem>>, vector<8x256xf32>,
    %c241_i32 = arith.constant 241 : i32
    %33 = tpu.dynamic_rotate %6 by %c241_i32 dim 1 : vector<8x256xf32>, i32 -> vector<8x256xf32>
    %34 = vector.extract_strided_slice %0 {offsets = [6, 0], sizes = [1, 256], strides = [1, 1]} : vector<9x256xf32> to vector<1x256xf32>
    %35 = vector.broadcast %34 : vector<1x256xf32> to vector<8x256xf32>
    %36 = arith.mulf %33, %35 : vector<8x256xf32>
    %c48 = arith.constant 48 : index
    %c0_15 = arith.constant 0 : index
    %37 = vector.load %arg10[%c48, %c0_15] : memref<72x256xf32, #tpu.memory_space<vmem>>, vector<8x256xf32>
    tpu.vector_store %arg10[%c48, %c0_15], %36 {strides = array<i32>} : memref<72x256xf32, #tpu.memory_space<vmem>>, vector<8x256xf32>,
    %c240_i32 = arith.constant 240 : i32
    %38 = tpu.dynamic_rotate %6 by %c240_i32 dim 1 : vector<8x256xf32>, i32 -> vector<8x256xf32>
    %39 = vector.extract_strided_slice %0 {offsets = [7, 0], sizes = [1, 256], strides = [1, 1]} : vector<9x256xf32> to vector<1x256xf32>
    %40 = vector.broadcast %39 : vector<1x256xf32> to vector<8x256xf32>
    %41 = arith.mulf %38, %40 : vector<8x256xf32>
    %c56 = arith.constant 56 : index
    %c0_16 = arith.constant 0 : index
    %42 = vector.load %arg10[%c56, %c0_16] : memref<72x256xf32, #tpu.memory_space<vmem>>, vector<8x256xf32>
    tpu.vector_store %arg10[%c56, %c0_16], %41 {strides = array<i32>} : memref<72x256xf32, #tpu.memory_space<vmem>>, vector<8x256xf32>,
    %c239_i32 = arith.constant 239 : i32
    %43 = tpu.dynamic_rotate %6 by %c239_i32 dim 1 : vector<8x256xf32>, i32 -> vector<8x256xf32>
    %44 = vector.extract_strided_slice %0 {offsets = [8, 0], sizes = [1, 256], strides = [1, 1]} : vector<9x256xf32> to vector<1x256xf32>
    %45 = vector.broadcast %44 : vector<1x256xf32> to vector<8x256xf32>
    %46 = arith.mulf %43, %45 : vector<8x256xf32>
    %c64 = arith.constant 64 : index
    %c0_17 = arith.constant 0 : index
    %47 = vector.load %arg10[%c64, %c0_17] : memref<72x256xf32, #tpu.memory_space<vmem>>, vector<8x256xf32>
    tpu.vector_store %arg10[%c64, %c0_17], %46 {strides = array<i32>} : memref<72x256xf32, #tpu.memory_space<vmem>>, vector<8x256xf32>,
    %c0_18 = arith.constant 0 : index
    %c0_19 = arith.constant 0 : index
    %48 = vector.load %arg5[%c0_18, %c0_19] : memref<4x72xf32, #tpu.memory_space<vmem>>, vector<4x72xf32>
    %c0_20 = arith.constant 0 : index
    %c0_21 = arith.constant 0 : index
    %49 = vector.load %arg10[%c0_20, %c0_21] : memref<72x256xf32, #tpu.memory_space<vmem>>, vector<72x256xf32>
    %cst_22 = arith.constant dense<0.000000e+00> : vector<4x256xf32>
    %50 = tpu.matmul %48, %49, %cst_22 {dimension_numbers = #tpu.dot_dimension_numbers<[1], [0], [0], [1], [0, 0, 1, 1], [], []>} : vector<4x72xf32>, vector<72x256xf32>, vector<4x256xf32> -> vector<4x256xf32>
    %c0_23 = arith.constant 0 : index
    %c0_24 = arith.constant 0 : index
    %51 = vector.load %arg7[%c0_23, %c0_24] : memref<4x1xf32, #tpu.memory_space<vmem>>, vector<4x1xf32>
    %52 = vector.broadcast %51 : vector<4x1xf32> to vector<4x256xf32>
    %53 = arith.addf %50, %52 : vector<4x256xf32>
    %cst_25 = arith.constant 0.000000e+00 : f32
    %54 = vector.broadcast %cst_25 : f32 to vector<4x256xf32>
    %55 = arith.maximumf %53, %54 : vector<4x256xf32>
    %c17_i32_26 = arith.constant 17 : i32
    %56 = tpu.dynamic_rotate %55 by %c17_i32_26 dim 1 : vector<4x256xf32>, i32 -> vector<4x256xf32>
    %57 = vector.extract_strided_slice %0 {offsets = [0, 0], sizes = [1, 256], strides = [1, 1]} : vector<9x256xf32> to vector<1x256xf32>
    %58 = vector.broadcast %57 : vector<1x256xf32> to vector<4x256xf32>
    %59 = arith.mulf %56, %58 : vector<4x256xf32>
    %c0_27 = arith.constant 0 : index
    %c0_28 = arith.constant 0 : index
    %60 = vector.load %arg10[%c0_27, %c0_28] : memref<72x256xf32, #tpu.memory_space<vmem>>, vector<4x256xf32>
    tpu.vector_store %arg10[%c0_27, %c0_28], %59 {strides = array<i32>} : memref<72x256xf32, #tpu.memory_space<vmem>>, vector<4x256xf32>,
    %c16_i32_29 = arith.constant 16 : i32
    %61 = tpu.dynamic_rotate %55 by %c16_i32_29 dim 1 : vector<4x256xf32>, i32 -> vector<4x256xf32>
    %62 = vector.extract_strided_slice %0 {offsets = [1, 0], sizes = [1, 256], strides = [1, 1]} : vector<9x256xf32> to vector<1x256xf32>
    %63 = vector.broadcast %62 : vector<1x256xf32> to vector<4x256xf32>
    %64 = arith.mulf %61, %63 : vector<4x256xf32>
    %c4 = arith.constant 4 : index
    %c0_30 = arith.constant 0 : index
    %65 = vector.load %arg10[%c4, %c0_30] : memref<72x256xf32, #tpu.memory_space<vmem>>, vector<4x256xf32>
    tpu.vector_store %arg10[%c4, %c0_30], %64 {strides = array<i32>} : memref<72x256xf32, #tpu.memory_space<vmem>>, vector<4x256xf32>,
    %c15_i32_31 = arith.constant 15 : i32
    %66 = tpu.dynamic_rotate %55 by %c15_i32_31 dim 1 : vector<4x256xf32>, i32 -> vector<4x256xf32>
    %67 = vector.extract_strided_slice %0 {offsets = [2, 0], sizes = [1, 256], strides = [1, 1]} : vector<9x256xf32> to vector<1x256xf32>
    %68 = vector.broadcast %67 : vector<1x256xf32> to vector<4x256xf32>
    %69 = arith.mulf %66, %68 : vector<4x256xf32>
    %c8_32 = arith.constant 8 : index
    %c0_33 = arith.constant 0 : index
    %70 = vector.load %arg10[%c8_32, %c0_33] : memref<72x256xf32, #tpu.memory_space<vmem>>, vector<4x256xf32>
    tpu.vector_store %arg10[%c8_32, %c0_33], %69 {strides = array<i32>} : memref<72x256xf32, #tpu.memory_space<vmem>>, vector<4x256xf32>,
    %c1_i32_34 = arith.constant 1 : i32
    %71 = tpu.dynamic_rotate %55 by %c1_i32_34 dim 1 : vector<4x256xf32>, i32 -> vector<4x256xf32>
    %72 = vector.extract_strided_slice %0 {offsets = [3, 0], sizes = [1, 256], strides = [1, 1]} : vector<9x256xf32> to vector<1x256xf32>
    %73 = vector.broadcast %72 : vector<1x256xf32> to vector<4x256xf32>
    %74 = arith.mulf %71, %73 : vector<4x256xf32>
    %c12 = arith.constant 12 : index
    %c0_35 = arith.constant 0 : index
    %75 = vector.load %arg10[%c12, %c0_35] : memref<72x256xf32, #tpu.memory_space<vmem>>, vector<4x256xf32>
    tpu.vector_store %arg10[%c12, %c0_35], %74 {strides = array<i32>} : memref<72x256xf32, #tpu.memory_space<vmem>>, vector<4x256xf32>,
    %c16_36 = arith.constant 16 : index
    %c0_37 = arith.constant 0 : index
    %76 = vector.load %arg10[%c16_36, %c0_37] : memref<72x256xf32, #tpu.memory_space<vmem>>, vector<4x256xf32>
    tpu.vector_store %arg10[%c16_36, %c0_37], %55 {strides = array<i32>} : memref<72x256xf32, #tpu.memory_space<vmem>>, vector<4x256xf32>,
    %c255_i32_38 = arith.constant 255 : i32
    %77 = tpu.dynamic_rotate %55 by %c255_i32_38 dim 1 : vector<4x256xf32>, i32 -> vector<4x256xf32>
    %78 = vector.extract_strided_slice %0 {offsets = [5, 0], sizes = [1, 256], strides = [1, 1]} : vector<9x256xf32> to vector<1x256xf32>
    %79 = vector.broadcast %78 : vector<1x256xf32> to vector<4x256xf32>
    %80 = arith.mulf %77, %79 : vector<4x256xf32>
    %c20 = arith.constant 20 : index
    %c0_39 = arith.constant 0 : index
    %81 = vector.load %arg10[%c20, %c0_39] : memref<72x256xf32, #tpu.memory_space<vmem>>, vector<4x256xf32>
    tpu.vector_store %arg10[%c20, %c0_39], %80 {strides = array<i32>} : memref<72x256xf32, #tpu.memory_space<vmem>>, vector<4x256xf32>,
    %c241_i32_40 = arith.constant 241 : i32
    %82 = tpu.dynamic_rotate %55 by %c241_i32_40 dim 1 : vector<4x256xf32>, i32 -> vector<4x256xf32>
    %83 = vector.extract_strided_slice %0 {offsets = [6, 0], sizes = [1, 256], strides = [1, 1]} : vector<9x256xf32> to vector<1x256xf32>
    %84 = vector.broadcast %83 : vector<1x256xf32> to vector<4x256xf32>
    %85 = arith.mulf %82, %84 : vector<4x256xf32>
    %c24_41 = arith.constant 24 : index
    %c0_42 = arith.constant 0 : index
    %86 = vector.load %arg10[%c24_41, %c0_42] : memref<72x256xf32, #tpu.memory_space<vmem>>, vector<4x256xf32>
    tpu.vector_store %arg10[%c24_41, %c0_42], %85 {strides = array<i32>} : memref<72x256xf32, #tpu.memory_space<vmem>>, vector<4x256xf32>,
    %c240_i32_43 = arith.constant 240 : i32
    %87 = tpu.dynamic_rotate %55 by %c240_i32_43 dim 1 : vector<4x256xf32>, i32 -> vector<4x256xf32>
    %88 = vector.extract_strided_slice %0 {offsets = [7, 0], sizes = [1, 256], strides = [1, 1]} : vector<9x256xf32> to vector<1x256xf32>
    %89 = vector.broadcast %88 : vector<1x256xf32> to vector<4x256xf32>
    %90 = arith.mulf %87, %89 : vector<4x256xf32>
    %c28 = arith.constant 28 : index
    %c0_44 = arith.constant 0 : index
    %91 = vector.load %arg10[%c28, %c0_44] : memref<72x256xf32, #tpu.memory_space<vmem>>, vector<4x256xf32>
    tpu.vector_store %arg10[%c28, %c0_44], %90 {strides = array<i32>} : memref<72x256xf32, #tpu.memory_space<vmem>>, vector<4x256xf32>,
    %c239_i32_45 = arith.constant 239 : i32
    %92 = tpu.dynamic_rotate %55 by %c239_i32_45 dim 1 : vector<4x256xf32>, i32 -> vector<4x256xf32>
    %93 = vector.extract_strided_slice %0 {offsets = [8, 0], sizes = [1, 256], strides = [1, 1]} : vector<9x256xf32> to vector<1x256xf32>
    %94 = vector.broadcast %93 : vector<1x256xf32> to vector<4x256xf32>
    %95 = arith.mulf %92, %94 : vector<4x256xf32>
    %c32_46 = arith.constant 32 : index
    %c0_47 = arith.constant 0 : index
    %96 = vector.load %arg10[%c32_46, %c0_47] : memref<72x256xf32, #tpu.memory_space<vmem>>, vector<4x256xf32>
    tpu.vector_store %arg10[%c32_46, %c0_47], %95 {strides = array<i32>} : memref<72x256xf32, #tpu.memory_space<vmem>>, vector<4x256xf32>,
    %c0_48 = arith.constant 0 : index
    %c0_49 = arith.constant 0 : index
    %97 = vector.load %arg6[%c0_48, %c0_49] : memref<4x36xf32, #tpu.memory_space<vmem>>, vector<4x36xf32>
    %c0_50 = arith.constant 0 : index
    %c0_51 = arith.constant 0 : index
    %98 = vector.load %arg10[%c0_50, %c0_51] : memref<72x256xf32, #tpu.memory_space<vmem>>, vector<36x256xf32>
    %cst_52 = arith.constant dense<0.000000e+00> : vector<4x256xf32>
    %99 = tpu.matmul %97, %98, %cst_52 {dimension_numbers = #tpu.dot_dimension_numbers<[1], [0], [0], [1], [0, 0, 1, 1], [], []>} : vector<4x36xf32>, vector<36x256xf32>, vector<4x256xf32> -> vector<4x256xf32>
    %c0_53 = arith.constant 0 : index
    %c0_54 = arith.constant 0 : index
    %100 = vector.load %arg8[%c0_53, %c0_54] : memref<4x1xf32, #tpu.memory_space<vmem>>, vector<4x1xf32>
    %101 = vector.broadcast %100 : vector<4x1xf32> to vector<4x256xf32>
    %102 = arith.addf %99, %101 : vector<4x256xf32>
    %cst_55 = arith.constant 0.000000e+00 : f32
    %103 = vector.broadcast %cst_55 : f32 to vector<4x256xf32>
    %104 = arith.maximumf %102, %103 : vector<4x256xf32>
    %c0_56 = arith.constant 0 : index
    %c0_57 = arith.constant 0 : index
    %105 = vector.load %arg9[%c0_56, %c0_57] : memref<4x256xf32, #tpu.memory_space<vmem>>, vector<4x256xf32>
    tpu.vector_store %arg9[%c0_56, %c0_57], %104 {strides = array<i32>} : memref<4x256xf32, #tpu.memory_space<vmem>>, vector<4x256xf32>,
    return
  }
  func.func @transform_0(%arg0: i32) -> (i32, i32, i32) {
    %c0_i32 = arith.constant 0 : i32
    %c0_i32_0 = arith.constant 0 : i32
    %c0_i32_1 = arith.constant 0 : i32
    return %arg0, %c0_i32, %c0_i32_0 : i32, i32, i32
  }
  func.func @transform_1(%arg0: i32) -> (i32, i32) {
    %c0_i32 = arith.constant 0 : i32
    %c0_i32_0 = arith.constant 0 : i32
    return %c0_i32, %arg0 : i32, i32
  }
  func.func @transform_2(%arg0: i32) -> (i32, i32) {
    %c0_i32 = arith.constant 0 : i32
    %c0_i32_0 = arith.constant 0 : i32
    %c0_i32_1 = arith.constant 0 : i32
    return %c0_i32, %c0_i32_0 : i32, i32
  }
  func.func @transform_3(%arg0: i32) -> (i32, i32) {
    %c0_i32 = arith.constant 0 : i32
    %c0_i32_0 = arith.constant 0 : i32
    %c0_i32_1 = arith.constant 0 : i32
    return %c0_i32, %c0_i32_0 : i32, i32
  }
  func.func @transform_4(%arg0: i32) -> (i32, i32) {
    %c0_i32 = arith.constant 0 : i32
    %c0_i32_0 = arith.constant 0 : i32
    %c0_i32_1 = arith.constant 0 : i32
    return %c0_i32, %c0_i32_0 : i32, i32
  }
  func.func @transform_5(%arg0: i32) -> (i32, i32) {
    %c0_i32 = arith.constant 0 : i32
    %c0_i32_0 = arith.constant 0 : i32
    %c0_i32_1 = arith.constant 0 : i32
    return %c0_i32, %c0_i32_0 : i32, i32
  }
  func.func @transform_6(%arg0: i32) -> (i32, i32) {
    %c0_i32 = arith.constant 0 : i32
    %c0_i32_0 = arith.constant 0 : i32
    %c0_i32_1 = arith.constant 0 : i32
    return %c0_i32, %c0_i32_0 : i32, i32
  }
  func.func @transform_7(%arg0: i32) -> (i32, i32) {
    %c0_i32 = arith.constant 0 : i32
    %c0_i32_0 = arith.constant 0 : i32
    %c0_i32_1 = arith.constant 0 : i32
    return %c0_i32, %c0_i32_0 : i32, i32
  }
  func.func @transform_8(%arg0: i32) -> (i32, i32) {
    %c0_i32 = arith.constant 0 : i32
    %c0_i32_0 = arith.constant 0 : i32
    return %c0_i32, %arg0 : i32, i32
  }
}

</mosaic_0001>

<llo_original>
// kernel: tpu_custom_call.1
$region0: #{tpu_custom_call.1}
  #allocation0 [shape = 'u32[]', space=smem, size = 0x4, offset = 0x4, fixed_abs, tag = 'smem constant byte address 0x4 - core index']
  #allocation1 [shape = 'u32[144,128]{1,0:T(1,128)}', space=vmem, size = 0x12000, scoped, tag = 'internal scratch']
  #allocation2 [shape = 'f32[72,256]{1,0:T(8,128)}', space=vmem, size = 0x12000, scoped, tag = 'scratch operand']
  %s0 = inlined_call_operand.vmem [shape: f32[2,4,64], index: 0, kind: input, shape index: {}]
  %s1 = inlined_call_operand.hbm [shape: f32[4,512], index: 1, kind: input, shape index: {}]
  %s2 = inlined_call_operand.hbm [shape: f32[64,256], index: 2, kind: input, shape index: {}]
  %s3 = inlined_call_operand.hbm [shape: f32[9,256], index: 3, kind: input, shape index: {}]
  %s4 = inlined_call_operand.vmem [shape: f32[4,72], index: 4, kind: input, shape index: {}]
  %s5 = inlined_call_operand.vmem [shape: f32[4,36], index: 5, kind: input, shape index: {}]
  %s6 = inlined_call_operand.vmem [shape: f32[4,1], index: 6, kind: input, shape index: {}]
  %s7 = inlined_call_operand.vmem [shape: f32[4,1], index: 7, kind: input, shape index: {}]
  %s8 = inlined_call_operand.hbm [shape: f32[4,512], index: 8, kind: output, shape index: {}]
  %s9 = sld [smem:[#allocation0]]
  $region77: #{tpu_custom_call.1} parent=0
    _
  %s11 = ssub.s32 1, %s9
  %s12 = scalar_select 0, %s11, %s9
  $region1: #{tpu_custom_call.1} parent=0
    #allocation3 [shape = 'u8[8192]{0}', space=vmem, size = 0x2000, scoped, tag = 'input window, operand 1']
    #allocation4 [shape = 's32[2]{0}', space=sflag, size = 0x8, scoped, tag = 'scoped memory for tpu_custom_call.1']
    #allocation5 [shape = 's32[2]{0}', space=sflag, size = 0x8, scoped, tag = 'scoped memory for tpu_custom_call.1']
    #allocation6 [shape = 'u8[65536]{0}', space=vmem, size = 0x10000, scoped, tag = 'input window, operand 2, single buffered']
    #allocation7 [shape = 's32[1]{0}', space=sflag, size = 0x4, scoped, tag = 'scoped memory for tpu_custom_call.1']
    #allocation8 [shape = 'u8[16384]{0}', space=vmem, size = 0x4000, scoped, tag = 'input window, operand 3, single buffered']
    #allocation9 [shape = 'u8[8192]{0}', space=vmem, size = 0x2000, scoped, tag = 'output window, operand 0']
    %13 = vsyncpa [#allocation4], 0
    %s14 = scalar_lea.sflag [#allocation4], 1
    %15 = vsyncpa %s14, 0
    %16 = vsyncpa [#allocation7], 0
    %17 = vsyncpa [#allocation5], 0
    %s18 = scalar_lea.sflag [#allocation5], 1
    %19 = vsyncpa %s18, 0
    loop: start=0, step=1, limit=4
    $region2: #{tpu_custom_call.1} parent=1 // loop_pre_header
      _
    $region3: #{tpu_custom_call.1} parent=1 // loop_header
      %s21 = sphi 0, %s25
      %p22 = scmp.ge.s32.totalorder %s21, 4
      %s31 = sphi 0, %s33
      %s34 = sphi 0, %s31
      %s35 = sphi 0, %s34
      %s51 = sphi 0, %s35
      %s57 = sphi 0, %s59
      %s60 = sphi 0, %s57
      %s61 = sphi 0, %s60
      %s77 = sphi 0, %s61
      %s81 = sphi 0, %s81
      %s83 = sphi 0, %s81
      %s84 = sphi 0, %s83
      %s98 = sphi 0, %s84
      %s102 = sphi 0, %s102
      %s104 = sphi 0, %s102
      %s105 = sphi 0, %s104
      %s119 = sphi 0, %s105
      %s123 = sphi 0, %s123
      %s125 = sphi 0, %s123
      %s126 = sphi 0, %s125
      %s140 = sphi 0, %s126
      %s144 = sphi 0, %s144
      %s146 = sphi 0, %s144
      %s147 = sphi 0, %s146
      %s161 = sphi 0, %s147
      %s165 = sphi 0, %s165
      %s167 = sphi 0, %s165
      %s168 = sphi 0, %s167
      %s182 = sphi 0, %s168
      %s186 = sphi 0, %s186
      %s188 = sphi 0, %s186
      %s189 = sphi 0, %s188
      %s203 = sphi 0, %s189
      %s209 = sphi 0, %s211
      %s212 = sphi 0, %s209
      %s213 = sphi 0, %s212
      %s229 = sphi 0, %s213
    $region4: #{tpu_custom_call.1} parent=1 // loop_header_branch
      %24 = sbr.rel (%p22) target = $region8
    $region5: #{tpu_custom_call.1} parent=1 // loop_body
      %s26 = ssub.s32 %s21, 1
      %s27 = ssub.s32 %s21, 2
      %s28 = sadd.s32 %s21, 1
      %s29 = ssub.s32 %s21, %s28
      %p30 = scmp.eq.s32.totalorder %s29, 0
      %s32 = sadd.s32 %s31, 1
      %s33 = scalar_select %p30, %s31, %s32
      %p36 = pneg %p30
      %p37 = scmp.eq.s32.totalorder %s21, 1
      %p38 = por %p36, %p37
      %p39 = scmp.ne.s32.totalorder %s31, %s34
      %p40 = scmp.eq.s32.totalorder %s21, 0
      %p41 = por %p39, %p40
      %p42 = scmp.ne.s32.totalorder %s31, %s34
      %p43 = scmp.eq.s32.totalorder %s26, 1
      %p44 = por %p42, %p43
      %p45 = scmp.ne.s32.totalorder %s34, %s35
      %p46 = scmp.eq.s32.totalorder %s26, 0
      %p47 = por %p45, %p46
      %p48 = scmp.ne.s32.totalorder %s34, %s35
      %p49 = scmp.eq.s32.totalorder %s27, 1
      %p50 = por %p48, %p49
      %p52 = scmp.ne.s32.totalorder %s35, %s51
      %p53 = scmp.eq.s32.totalorder %s27, 0
      %p54 = por %p52, %p53
      %s55 = ssub.s32 %s21, %s28
      %p56 = scmp.eq.s32.totalorder %s55, 0
      %s58 = sadd.s32 %s57, 1
      %s59 = scalar_select %p56, %s57, %s58
      %p62 = pneg %p56
      %p63 = scmp.eq.s32.totalorder %s21, 1
      %p64 = por %p62, %p63
      %p65 = scmp.ne.s32.totalorder %s57, %s60
      %p66 = scmp.eq.s32.totalorder %s21, 0
      %p67 = por %p65, %p66
      %p68 = scmp.ne.s32.totalorder %s57, %s60
      %p69 = scmp.eq.s32.totalorder %s26, 1
      %p70 = por %p68, %p69
      %p71 = scmp.ne.s32.totalorder %s60, %s61
      %p72 = scmp.eq.s32.totalorder %s26, 0
      %p73 = por %p71, %p72
      %p74 = scmp.ne.s32.totalorder %s60, %s61
      %p75 = scmp.eq.s32.totalorder %s27, 1
      %p76 = por %p74, %p75
      %p78 = scmp.ne.s32.totalorder %s61, %s77
      %p79 = scmp.eq.s32.totalorder %s27, 0
      %p80 = por %p78, %p79
      %s82 = sadd.s32 %s81, 1
      %p85 = scmp.eq.s32.totalorder %s21, 1
      %p86 = scmp.ne.s32.totalorder %s81, %s83
      %p87 = scmp.eq.s32.totalorder %s21, 0
      %p88 = por %p86, %p87
      %p89 = scmp.ne.s32.totalorder %s81, %s83
      %p90 = scmp.eq.s32.totalorder %s26, 1
      %p91 = por %p89, %p90
      %p92 = scmp.ne.s32.totalorder %s83, %s84
      %p93 = scmp.eq.s32.totalorder %s26, 0
      %p94 = por %p92, %p93
      %p95 = scmp.ne.s32.totalorder %s83, %s84
      %p96 = scmp.eq.s32.totalorder %s27, 1
      %p97 = por %p95, %p96
      %p99 = scmp.ne.s32.totalorder %s84, %s98
      %p100 = scmp.eq.s32.totalorder %s27, 0
      %p101 = por %p99, %p100
      %s103 = sadd.s32 %s102, 1
      %p106 = scmp.eq.s32.totalorder %s21, 1
      %p107 = scmp.ne.s32.totalorder %s102, %s104
      %p108 = scmp.eq.s32.totalorder %s21, 0
      %p109 = por %p107, %p108
      %p110 = scmp.ne.s32.totalorder %s102, %s104
      %p111 = scmp.eq.s32.totalorder %s26, 1
      %p112 = por %p110, %p111
      %p113 = scmp.ne.s32.totalorder %s104, %s105
      %p114 = scmp.eq.s32.totalorder %s26, 0
      %p115 = por %p113, %p114
      %p116 = scmp.ne.s32.totalorder %s104, %s105
      %p117 = scmp.eq.s32.totalorder %s27, 1
      %p118 = por %p116, %p117
      %p120 = scmp.ne.s32.totalorder %s105, %s119
      %p121 = scmp.eq.s32.totalorder %s27, 0
      %p122 = por %p120, %p121
      %s124 = sadd.s32 %s123, 1
      %p127 = scmp.eq.s32.totalorder %s21, 1
      %p128 = scmp.ne.s32.totalorder %s123, %s125
      %p129 = scmp.eq.s32.totalorder %s21, 0
      %p130 = por %p128, %p129
      %p131 = scmp.ne.s32.totalorder %s123, %s125
      %p132 = scmp.eq.s32.totalorder %s26, 1
      %p133 = por %p131, %p132
      %p134 = scmp.ne.s32.totalorder %s125, %s126
      %p135 = scmp.eq.s32.totalorder %s26, 0
      %p136 = por %p134, %p135
      %p137 = scmp.ne.s32.totalorder %s125, %s126
      %p138 = scmp.eq.s32.totalorder %s27, 1
      %p139 = por %p137, %p138
      %p141 = scmp.ne.s32.totalorder %s126, %s140
      %p142 = scmp.eq.s32.totalorder %s27, 0
      %p143 = por %p141, %p142
      %s145 = sadd.s32 %s144, 1
      %p148 = scmp.eq.s32.totalorder %s21, 1
      %p149 = scmp.ne.s32.totalorder %s144, %s146
      %p150 = scmp.eq.s32.totalorder %s21, 0
      %p151 = por %p149, %p150
      %p152 = scmp.ne.s32.totalorder %s144, %s146
      %p153 = scmp.eq.s32.totalorder %s26, 1
      %p154 = por %p152, %p153
      %p155 = scmp.ne.s32.totalorder %s146, %s147
      %p156 = scmp.eq.s32.totalorder %s26, 0
      %p157 = por %p155, %p156
      %p158 = scmp.ne.s32.totalorder %s146, %s147
      %p159 = scmp.eq.s32.totalorder %s27, 1
      %p160 = por %p158, %p159
      %p162 = scmp.ne.s32.totalorder %s147, %s161
      %p163 = scmp.eq.s32.totalorder %s27, 0
      %p164 = por %p162, %p163
      %s166 = sadd.s32 %s165, 1
      %p169 = scmp.eq.s32.totalorder %s21, 1
      %p170 = scmp.ne.s32.totalorder %s165, %s167
      %p171 = scmp.eq.s32.totalorder %s21, 0
      %p172 = por %p170, %p171
      %p173 = scmp.ne.s32.totalorder %s165, %s167
      %p174 = scmp.eq.s32.totalorder %s26, 1
      %p175 = por %p173, %p174
      %p176 = scmp.ne.s32.totalorder %s167, %s168
      %p177 = scmp.eq.s32.totalorder %s26, 0
      %p178 = por %p176, %p177
      %p179 = scmp.ne.s32.totalorder %s167, %s168
      %p180 = scmp.eq.s32.totalorder %s27, 1
      %p181 = por %p179, %p180
      %p183 = scmp.ne.s32.totalorder %s168, %s182
      %p184 = scmp.eq.s32.totalorder %s27, 0
      %p185 = por %p183, %p184
      %s187 = sadd.s32 %s186, 1
      %p190 = scmp.eq.s32.totalorder %s21, 1
      %p191 = scmp.ne.s32.totalorder %s186, %s188
      %p192 = scmp.eq.s32.totalorder %s21, 0
      %p193 = por %p191, %p192
      %p194 = scmp.ne.s32.totalorder %s186, %s188
      %p195 = scmp.eq.s32.totalorder %s26, 1
      %p196 = por %p194, %p195
      %p197 = scmp.ne.s32.totalorder %s188, %s189
      %p198 = scmp.eq.s32.totalorder %s26, 0
      %p199 = por %p197, %p198
      %p200 = scmp.ne.s32.totalorder %s188, %s189
      %p201 = scmp.eq.s32.totalorder %s27, 1
      %p202 = por %p200, %p201
      %p204 = scmp.ne.s32.totalorder %s189, %s203
      %p205 = scmp.eq.s32.totalorder %s27, 0
      %p206 = por %p204, %p205
      %s207 = ssub.s32 %s21, %s28
      %p208 = scmp.eq.s32.totalorder %s207, 0
      %s210 = sadd.s32 %s209, 1
      %s211 = scalar_select %p208, %s209, %s210
      %p214 = pneg %p208
      %p215 = scmp.eq.s32.totalorder %s21, 1
      %p216 = por %p214, %p215
      %p217 = scmp.ne.s32.totalorder %s209, %s212
      %p218 = scmp.eq.s32.totalorder %s21, 0
      %p219 = por %p217, %p218
      %p220 = scmp.ne.s32.totalorder %s209, %s212
      %p221 = scmp.eq.s32.totalorder %s26, 1
      %p222 = por %p220, %p221
      %p223 = scmp.ne.s32.totalorder %s212, %s213
      %p224 = scmp.eq.s32.totalorder %s26, 0
      %p225 = por %p223, %p224
      %p226 = scmp.ne.s32.totalorder %s212, %s213
      %p227 = scmp.eq.s32.totalorder %s27, 1
      %p228 = por %p226, %p227
      %p230 = scmp.ne.s32.totalorder %s213, %s229
      %p231 = scmp.eq.s32.totalorder %s27, 0
      %p232 = por %p230, %p231
      %p233 = scmp.le.s32.totalorder 1, %s21
      %p234 = scmp.lt.s32.totalorder %s21, 3
      %p235 = pnand %p233, %p234
      %p236 = pneg %p235
      // Predicated region
      $region9: #{tpu_custom_call.1} parent=5 // pred_check
        _
      $region10: #{tpu_custom_call.1} parent=5 // pred_check_branch
        %238 = sbr.rel (%p235) target = $region12
      $region11: #{tpu_custom_call.1} parent=5 // pred_region
        %s239 = ssub.s32 %s21, 1
        // Predicated region
        $region13: #{tpu_custom_call.1} parent=11 // pred_check
          %p240 = pneg %p94
        $region14: #{tpu_custom_call.1} parent=11 // pred_check_branch
          %242 = sbr.rel (%p240) target = $region16
        $region15: #{tpu_custom_call.1} parent=11 // pred_region
          %s244 = ssub.s32 2048, 2048
          %245 = vsyncadd [#allocation7], %s244
          %s246 = sshll.u32 [#allocation6], 4
          %s247 = int_to_ptr.vmem [resolvable:$true] %s246
          %252 = dma.hbm_to_vmem [thread:$0]  %s2, 2048, %s247, [#allocation7], 256, 256, 16
        $region16: #{tpu_custom_call.1} parent=11 // pred_fallthru
          _
        // Predicated region
        $region17: #{tpu_custom_call.1} parent=11 // pred_check
          %p253 = pneg %p115
        $region18: #{tpu_custom_call.1} parent=11 // pred_check_branch
          %255 = sbr.rel (%p253) target = $region20
        $region19: #{tpu_custom_call.1} parent=11 // pred_region
          %s257 = ssub.s32 512, 512
          %258 = vsyncadd [#allocation7], %s257
          %s259 = sshll.u32 [#allocation8], 4
          %s260 = int_to_ptr.vmem [resolvable:$true] %s259
          %265 = dma.hbm_to_vmem [thread:$0]  %s3, 512, %s260, [#allocation7], 256, 256, 16
        $region20: #{tpu_custom_call.1} parent=11 // pred_fallthru
          _
        // Predicated region
        $region21: #{tpu_custom_call.1} parent=11 // pred_check
          %p266 = pneg %p136
        $region22: #{tpu_custom_call.1} parent=11 // pred_check_branch
          %268 = sbr.rel (%p266) target = $region24
        $region23: #{tpu_custom_call.1} parent=11 // pred_region
          _
        $region24: #{tpu_custom_call.1} parent=11 // pred_fallthru
          _
        // Predicated region
        $region25: #{tpu_custom_call.1} parent=11 // pred_check
          %p269 = pneg %p157
        $region26: #{tpu_custom_call.1} parent=11 // pred_check_branch
          %271 = sbr.rel (%p269) target = $region28
        $region27: #{tpu_custom_call.1} parent=11 // pred_region
          _
        $region28: #{tpu_custom_call.1} parent=11 // pred_fallthru
          _
        // Predicated region
        $region29: #{tpu_custom_call.1} parent=11 // pred_check
          %p272 = pneg %p178
        $region30: #{tpu_custom_call.1} parent=11 // pred_check_branch
          %274 = sbr.rel (%p272) target = $region32
        $region31: #{tpu_custom_call.1} parent=11 // pred_region
          _
        $region32: #{tpu_custom_call.1} parent=11 // pred_fallthru
          _
        // Predicated region
        $region33: #{tpu_custom_call.1} parent=11 // pred_check
          %p275 = pneg %p199
        $region34: #{tpu_custom_call.1} parent=11 // pred_check_branch
          %277 = sbr.rel (%p275) target = $region36
        $region35: #{tpu_custom_call.1} parent=11 // pred_region
          _
        $region36: #{tpu_custom_call.1} parent=11 // pred_fallthru
          _
      $region12: #{tpu_custom_call.1} parent=5 // pred_fallthru
        _
      %p278 = scmp.lt.s32.totalorder %s21, 2
      // Predicated region
      $region37: #{tpu_custom_call.1} parent=5 // pred_check
        %p279 = pneg %p278
      $region38: #{tpu_custom_call.1} parent=5 // pred_check_branch
        %281 = sbr.rel (%p279) target = $region40
      $region39: #{tpu_custom_call.1} parent=5 // pred_region
        // Predicated region
        $region41: #{tpu_custom_call.1} parent=39 // pred_check
          %p282 = pneg %p41
        $region42: #{tpu_custom_call.1} parent=39 // pred_check_branch
          %284 = sbr.rel (%p282) target = $region44
        $region43: #{tpu_custom_call.1} parent=39 // pred_region
          %p285 = scmp.lt.s32.totalorder %s21, 1
          %s286 = scalar_select %p285, %s21, 1
          %s287 = smul.addr %s286, 4
          %s288 = scalar_lea.vmem %s0, %s287
        $region44: #{tpu_custom_call.1} parent=39 // pred_fallthru
          _
        // Predicated region
        $region45: #{tpu_custom_call.1} parent=39 // pred_check
          %p289 = pneg %p67
        $region46: #{tpu_custom_call.1} parent=39 // pred_check_branch
          %291 = sbr.rel (%p289) target = $region48
        $region47: #{tpu_custom_call.1} parent=39 // pred_region
          %s292 = sand.u32 %s57, 1
          %s293 = scalar_lea.sflag [#allocation4], %s292
          %s294 = sand.u32 %s57, 1
          %s295 = smul.addr %s294, 8
          %s296 = scalar_lea.vmem [#allocation3], %s295
          %s297 = smul.u32 2, %s21
          %s299 = ssub.s32 128, 128
          %300 = vsyncadd %s293, %s299
          %s301 = smul.addr %s297, 64
          %s302 = scalar_lea.hbm %s1, %s301
          %s304 = sshll.u32 %s296, 4
          %s305 = int_to_ptr.vmem [resolvable:$true] %s304
          %307 = dma.hbm_to_vmem [thread:$0]  %s302, 128, %s305, %s293
        $region48: #{tpu_custom_call.1} parent=39 // pred_fallthru
          _
      $region40: #{tpu_custom_call.1} parent=5 // pred_fallthru
        _
      %p308 = scmp.le.s32.totalorder 1, %s21
      %p309 = scmp.lt.s32.totalorder %s21, 3
      %p310 = pnand %p308, %p309
      %p311 = pneg %p310
      // Predicated region
      $region49: #{tpu_custom_call.1} parent=5 // pred_check
        _
      $region50: #{tpu_custom_call.1} parent=5 // pred_check_branch
        %313 = sbr.rel (%p310) target = $region52
      $region51: #{tpu_custom_call.1} parent=5 // pred_region
        %s314 = ssub.s32 %s21, 1
        %s315 = sand.u32 %s60, 1
        %s316 = scalar_lea.sflag [#allocation4], %s315
        %s317 = sand.u32 %s60, 1
        %s318 = smul.addr %s317, 8
        %s319 = scalar_lea.vmem [#allocation3], %s318
        // Predicated region
        $region53: #{tpu_custom_call.1} parent=51 // pred_check
          %p320 = pneg %p73
        $region54: #{tpu_custom_call.1} parent=51 // pred_check_branch
          %322 = sbr.rel (%p320) target = $region56
        $region55: #{tpu_custom_call.1} parent=51 // pred_region
          %323 = dma.done %s316, 128
        $region56: #{tpu_custom_call.1} parent=51 // pred_fallthru
          _
        // Predicated region
        $region57: #{tpu_custom_call.1} parent=51 // pred_check
          %p324 = pneg %p94
        $region58: #{tpu_custom_call.1} parent=51 // pred_check_branch
          %326 = sbr.rel (%p324) target = $region60
        $region59: #{tpu_custom_call.1} parent=51 // pred_region
          %327 = dma.done [#allocation7], 2048
        $region60: #{tpu_custom_call.1} parent=51 // pred_fallthru
          _
        // Predicated region
        $region61: #{tpu_custom_call.1} parent=51 // pred_check
          %p328 = pneg %p115
        $region62: #{tpu_custom_call.1} parent=51 // pred_check_branch
          %330 = sbr.rel (%p328) target = $region64
        $region63: #{tpu_custom_call.1} parent=51 // pred_region
          %331 = dma.done [#allocation7], 512
        $region64: #{tpu_custom_call.1} parent=51 // pred_fallthru
          _
        %p332 = scmp.lt.s32.totalorder %s26, 1
        %s333 = scalar_select %p332, %s26, 1
        %s334 = smul.addr %s333, 4
        %s335 = scalar_lea.vmem %s0, %s334
        %p336 = pneg %p47
        %p337 = pneg %p44
        %s338 = sand.u32 %s60, 1
        %s339 = scalar_lea.sflag [#allocation4], %s338
        %s340 = sand.u32 %s60, 1
        %s341 = smul.addr %s340, 8
        %s342 = scalar_lea.vmem [#allocation3], %s341
        %p343 = pneg %p73
        %p344 = pneg %p70
        %p345 = pneg %p94
        %p346 = pneg %p91
        %p347 = pneg %p115
        %p348 = pneg %p112
        %p349 = pneg %p136
        %p350 = pneg %p133
        %p351 = pneg %p157
        %p352 = pneg %p154
        %p353 = pneg %p178
        %p354 = pneg %p175
        %p355 = pneg %p199
        %p356 = pneg %p196
        %p357 = pneg %p225
        %p358 = pneg %p222
        %s359 = sand.u32 %s212, 1
        %s360 = scalar_lea.sflag [#allocation5], %s359
        %s361 = sand.u32 %s212, 1
        %s362 = smul.addr %s361, 8
        %s363 = scalar_lea.vmem [#allocation9], %s362
        %p364 = scmp.lt.s32.totalorder %s26, 1
        %s365 = scalar_select %p364, %s26, 1
        %s366 = smul.addr %s365, 4
        %s367 = scalar_lea.vmem %s0, %s366
        %s368 = smul.u32 2, %s26
        %s369 = smul.u32 2, %s26
        %v370 = vld [vmem:[#allocation8] sm:$0xff]
        %v371 = vld [vmem:[#allocation8 + $0x8] sm:$0xff]
        %v372 = vld [vmem:[#allocation8 + $0x10] sm:$0x1]
        %v373 = vld [vmem:[#allocation8 + $0x18] sm:$0x1]
        %v374 = vld [vmem:[#allocation6] sm:$0xff]
        %v375 = vld [vmem:[#allocation6 + $0x8] sm:$0xff]
        %v376 = vld [vmem:[#allocation6 + $0x10] sm:$0xff]
        %v377 = vld [vmem:[#allocation6 + $0x18] sm:$0xff]
        %v378 = vld [vmem:[#allocation6 + $0x20] sm:$0xff]
        %v379 = vld [vmem:[#allocation6 + $0x28] sm:$0xff]
        %v380 = vld [vmem:[#allocation6 + $0x30] sm:$0xff]
        %v381 = vld [vmem:[#allocation6 + $0x38] sm:$0xff]
        %v382 = vld [vmem:[#allocation6 + $0x40] sm:$0xff]
        %v383 = vld [vmem:[#allocation6 + $0x48] sm:$0xff]
        %v384 = vld [vmem:[#allocation6 + $0x50] sm:$0xff]
        %v385 = vld [vmem:[#allocation6 + $0x58] sm:$0xff]
        %v386 = vld [vmem:[#allocation6 + $0x60] sm:$0xff]
        %v387 = vld [vmem:[#allocation6 + $0x68] sm:$0xff]
        %v388 = vld [vmem:[#allocation6 + $0x70] sm:$0xff]
        %v389 = vld [vmem:[#allocation6 + $0x78] sm:$0xff]
        %v390 = vld [vmem:[%s367] sm:$0xf]
        %vm391 = vcmask 523264
        %v393 = vsel %vm391, %v390, 0
        %395 = vmatprep.subr.mxu0 %v375
        %396 = vmatpush1.msra.mxu0 %v374
        %397 = vmatprep.subr.mxu0 %v377
        %398 = vmatpush1.msra.mxu0 %v376
        %399 = vmatprep.subr.mxu0 %v379
        %400 = vmatpush1.msra.mxu0 %v378
        %401 = vmatprep.subr.mxu0 %v381
        %402 = vmatpush1.msra.mxu0 %v380
        %403 = vmatprep.subr.mxu0 %v383
        %404 = vmatpush1.msra.mxu0 %v382
        %405 = vmatprep.subr.mxu0 %v385
        %406 = vmatpush1.msra.mxu0 %v384
        %407 = vmatprep.subr.mxu0 %v387
        %408 = vmatpush1.msra.mxu0 %v386
        %409 = vmatprep.subr.mxu0 %v389
        %410 = vmatpush1.msra.mxu0 %v388
        %411 = vmatprep.subr.mxu0 0.0
        %412 = vmatpush1.msra.mxu0 0.0
        %413 = vmatprep.subr.mxu0 0.0
        %414 = vmatpush1.msra.mxu0 0.0
        %415 = vmatprep.subr.mxu0 0.0
        %416 = vmatpush1.msra.mxu0 0.0
        %417 = vmatprep.subr.mxu0 0.0
        %418 = vmatpush1.msra.mxu0 0.0
        %419 = vmatprep.subr.mxu0 0.0
        %420 = vmatpush1.msra.mxu0 0.0
        %421 = vmatprep.subr.mxu0 0.0
        %422 = vmatpush1.msra.mxu0 0.0
        %423 = vmatprep.subr.mxu0 0.0
        %424 = vmatpush1.msra.mxu0 0.0
        %425 = vmatprep.subr.mxu0 0.0
        %426 = vmatpush1.msra.mxu0 0.0
        %427 = vmatprep.subr.mxu0 0.0
        %428 = vmatpush1.msra.mxu0 0.0
        %429 = vmatprep.subr.mxu0 0.0
        %430 = vmatpush1.msra.mxu0 0.0
        %431 = vmatprep.subr.mxu0 0.0
        %432 = vmatpush1.msra.mxu0 0.0
        %433 = vmatprep.subr.mxu0 0.0
        %434 = vmatpush1.msra.mxu0 0.0
        %435 = vmatprep.subr.mxu0 0.0
        %436 = vmatpush1.msra.mxu0 0.0
        %437 = vmatprep.subr.mxu0 0.0
        %438 = vmatpush1.msra.mxu0 0.0
        %439 = vmatprep.subr.mxu0 0.0
        %440 = vmatpush1.msra.mxu0 0.0
        %441 = vmatprep.subr.mxu0 0.0
        %442 = vmatpush1.msra.mxu0 0.0
        %443 = vmatprep.subr.mxu0 0.0
        %444 = vmatpush1.msra.mxu0 0.0
        %445 = vmatprep.subr.mxu0 0.0
        %446 = vmatpush1.msra.mxu0 0.0
        %447 = vmatprep.subr.mxu0 0.0
        %448 = vmatpush1.msra.mxu0 0.0
        %449 = vmatprep.subr.mxu0 0.0
        %450 = vmatpush1.msra.mxu0 0.0
        %451 = vmatprep.subr.mxu0 0.0
        %452 = vmatpush1.msra.mxu0 0.0
        %453 = vmatprep.subr.mxu0 0.0
        %454 = vmatpush1.msra.mxu0 0.0
        %455 = vmatprep.subr.mxu0 0.0
        %456 = vmatpush1.msra.mxu0 0.0
        %457 = vmatprep.subr.mxu0 0.0
        %458 = vmatpush1.msra.mxu0 0.0
        %459 = vmatprep.mubr.f32.mxu0 0.0
        %460 = vmatmul.mubr.f32.gmra.mrb[0].mxu0 %v393
        %v461 = vpop.f32.mrb[0].mxu0
        %v462 = vadd.f32 0.0, %v461
        %v463 = vpop.f32.mrb[0].mxu0
        %v464 = vadd.f32 0.0, %v463
        %465 = vdwg.mxu0
        %v466 = vld [vmem:[%s319] sm:$0xff]
        %v468 = vcombine.high %v466, %v466
        %v472 = vrot.slane %v462, 4
        %v473 = vrot.slane %v464, 4
        %vm476 = vcmask 1043456
        %v477 = vsel %vm476, %v466, %v472
        %v478 = vsel %vm476, %v468, %v473
        %479 = vrot.lane.b32.xlu0 %v477, 17
        %v480 = vpop.permute.xlu0 %479
        %481 = vrot.lane.b32.xlu0 %v478, 17
        %v482 = vpop.permute.xlu0 %481
        %v483 = vlaneseq
        %v484 = vand.u32 %v483, 127
        %vm485 = vcmp.lt.s32.totalorder %v484, 17
        %v486 = vsel %vm485, %v480, %v482
        %v487 = vsel %vm485, %v482, %v480
        %v488 = vlaneseq
        %v489 = vshrl.u32 %v488, 7
        %v490 = vsub.s32 0, %v489
        %v491 = vrot.slane %v370, %v490
        %v492 = vlaneseq
        %v493 = vshrl.u32 %v492, 7
        %v494 = vsub.s32 0, %v493
        %v495 = vrot.slane %v371, %v494
        %v496 = vmul.f32 %v487, %v491
        %v497 = vmul.f32 %v486, %v495
        %498 = vst [vmem:[#allocation2] sm:$0xff] %v496
        %499 = vst [vmem:[#allocation2 + $0x8] sm:$0xff] %v497
        %500 = vrot.lane.b32.xlu0 %v477, 16
        %v501 = vpop.permute.xlu0 %500
        %502 = vrot.lane.b32.xlu0 %v478, 16
        %v503 = vpop.permute.xlu0 %502
        %vm504 = vcmp.lt.s32.totalorder %v484, 16
        %v505 = vsel %vm504, %v501, %v503
        %v506 = vsel %vm504, %v503, %v501
        %v507 = vlaneseq
        %v508 = vshrl.u32 %v507, 7
        %v509 = vsub.s32 1, %v508
        %v510 = vrot.slane %v370, %v509
        %v511 = vlaneseq
        %v512 = vshrl.u32 %v511, 7
        %v513 = vsub.s32 1, %v512
        %v514 = vrot.slane %v371, %v513
        %v515 = vmul.f32 %v506, %v510
        %v516 = vmul.f32 %v505, %v514
        %517 = vst [vmem:[#allocation2 + $0x10] sm:$0xff] %v515
        %518 = vst [vmem:[#allocation2 + $0x18] sm:$0xff] %v516
        %519 = vrot.lane.b32.xlu0 %v477, 15
        %v520 = vpop.permute.xlu0 %519
        %521 = vrot.lane.b32.xlu0 %v478, 15
        %v522 = vpop.permute.xlu0 %521
        %vm523 = vcmp.lt.s32.totalorder %v484, 15
        %v524 = vsel %vm523, %v520, %v522
        %v525 = vsel %vm523, %v522, %v520
        %v526 = vlaneseq
        %v527 = vshrl.u32 %v526, 7
        %v528 = vsub.s32 2, %v527
        %v529 = vrot.slane %v370, %v528
        %v530 = vlaneseq
        %v531 = vshrl.u32 %v530, 7
        %v532 = vsub.s32 2, %v531
        %v533 = vrot.slane %v371, %v532
        %v534 = vmul.f32 %v525, %v529
        %v535 = vmul.f32 %v524, %v533
        %536 = vst [vmem:[#allocation2 + $0x20] sm:$0xff] %v534
        %537 = vst [vmem:[#allocation2 + $0x28] sm:$0xff] %v535
        %538 = vrot.lane.b32.xlu0 %v477, 1
        %v539 = vpop.permute.xlu0 %538
        %540 = vrot.lane.b32.xlu0 %v478, 1
        %v541 = vpop.permute.xlu0 %540
        %vm542 = vcmp.lt.s32.totalorder %v484, 1
        %v543 = vsel %vm542, %v539, %v541
        %v544 = vsel %vm542, %v541, %v539
        %v545 = vlaneseq
        %v546 = vshrl.u32 %v545, 7
        %v547 = vsub.s32 3, %v546
        %v548 = vrot.slane %v370, %v547
        %v549 = vlaneseq
        %v550 = vshrl.u32 %v549, 7
        %v551 = vsub.s32 3, %v550
        %v552 = vrot.slane %v371, %v551
        %v553 = vmul.f32 %v544, %v548
        %v554 = vmul.f32 %v543, %v552
        %555 = vst [vmem:[#allocation2 + $0x30] sm:$0xff] %v553
        %556 = vst [vmem:[#allocation2 + $0x38] sm:$0xff] %v554
        %557 = vst [vmem:[#allocation2 + $0x40] sm:$0xff] %v477
        %558 = vst [vmem:[#allocation2 + $0x48] sm:$0xff] %v478
        %559 = vrot.lane.b32.xlu0 %v477, 127
        %v560 = vpop.permute.xlu0 %559
        %561 = vrot.lane.b32.xlu0 %v478, 127
        %v562 = vpop.permute.xlu0 %561
        %vm563 = vcmp.lt.s32.totalorder %v484, 127
        %v564 = vsel %vm563, %v560, %v562
        %v565 = vsel %vm563, %v562, %v560
        %v566 = vlaneseq
        %v567 = vshrl.u32 %v566, 7
        %v568 = vsub.s32 5, %v567
        %v569 = vrot.slane %v370, %v568
        %v570 = vlaneseq
        %v571 = vshrl.u32 %v570, 7
        %v572 = vsub.s32 5, %v571
        %v573 = vrot.slane %v371, %v572
        %v574 = vmul.f32 %v564, %v569
        %v575 = vmul.f32 %v565, %v573
        %576 = vst [vmem:[#allocation2 + $0x50] sm:$0xff] %v574
        %577 = vst [vmem:[#allocation2 + $0x58] sm:$0xff] %v575
        %578 = vrot.lane.b32.xlu0 %v477, 113
        %v579 = vpop.permute.xlu0 %578
        %580 = vrot.lane.b32.xlu0 %v478, 113
        %v581 = vpop.permute.xlu0 %580
        %vm582 = vcmp.lt.s32.totalorder %v484, 113
        %v583 = vsel %vm582, %v579, %v581
        %v584 = vsel %vm582, %v581, %v579
        %v585 = vlaneseq
        %v586 = vshrl.u32 %v585, 7
        %v587 = vsub.s32 6, %v586
        %v588 = vrot.slane %v370, %v587
        %v589 = vlaneseq
        %v590 = vshrl.u32 %v589, 7
        %v591 = vsub.s32 6, %v590
        %v592 = vrot.slane %v371, %v591
        %v593 = vmul.f32 %v583, %v588
        %v594 = vmul.f32 %v584, %v592
        %595 = vst [vmem:[#allocation2 + $0x60] sm:$0xff] %v593
        %596 = vst [vmem:[#allocation2 + $0x68] sm:$0xff] %v594
        %597 = vrot.lane.b32.xlu0 %v477, 112
        %v598 = vpop.permute.xlu0 %597
        %599 = vrot.lane.b32.xlu0 %v478, 112
        %v600 = vpop.permute.xlu0 %599
        %vm601 = vcmp.lt.s32.totalorder %v484, 112
        %v602 = vsel %vm601, %v598, %v600
        %v603 = vsel %vm601, %v600, %v598
        %v604 = vlaneseq
        %v605 = vshrl.u32 %v604, 7
        %v606 = vsub.s32 7, %v605
        %v607 = vrot.slane %v370, %v606
        %v608 = vlaneseq
        %v609 = vshrl.u32 %v608, 7
        %v610 = vsub.s32 7, %v609
        %v611 = vrot.slane %v371, %v610
        %v612 = vmul.f32 %v602, %v607
        %v613 = vmul.f32 %v603, %v611
        %614 = vst [vmem:[#allocation2 + $0x70] sm:$0xff] %v612
        %615 = vst [vmem:[#allocation2 + $0x78] sm:$0xff] %v613
        %616 = vrot.lane.b32.xlu0 %v477, 111
        %v617 = vpop.permute.xlu0 %616
        %618 = vrot.lane.b32.xlu0 %v478, 111
        %v619 = vpop.permute.xlu0 %618
        %vm620 = vcmp.lt.s32.totalorder %v484, 111
        %v621 = vsel %vm620, %v617, %v619
        %v622 = vsel %vm620, %v619, %v617
        %v623 = vlaneseq
        %v624 = vshrl.u32 %v623, 7
        %v625 = vsub.s32 0, %v624
        %v626 = vrot.slane %v372, %v625
        %v627 = vlaneseq
        %v628 = vshrl.u32 %v627, 7
        %v629 = vsub.s32 0, %v628
        %v630 = vrot.slane %v373, %v629
        %v631 = vmul.f32 %v621, %v626
        %v632 = vmul.f32 %v622, %v630
        %633 = vst [vmem:[#allocation2 + $0x80] sm:$0xff] %v631
        %634 = vst [vmem:[#allocation2 + $0x88] sm:$0xff] %v632
        %v635 = vld [vmem:[%s4] sm:$0xf]
        %v636 = vld [vmem:[#allocation2] sm:$0xff]
        %v637 = vld [vmem:[#allocation2 + $0x8] sm:$0xff]
        %v638 = vld [vmem:[#allocation2 + $0x10] sm:$0xff]
        %v639 = vld [vmem:[#allocation2 + $0x18] sm:$0xff]
        %v640 = vld [vmem:[#allocation2 + $0x20] sm:$0xff]
        %v641 = vld [vmem:[#allocation2 + $0x28] sm:$0xff]
        %v642 = vld [vmem:[#allocation2 + $0x30] sm:$0xff]
        %v643 = vld [vmem:[#allocation2 + $0x38] sm:$0xff]
        %v644 = vld [vmem:[#allocation2 + $0x40] sm:$0xff]
        %v645 = vld [vmem:[#allocation2 + $0x48] sm:$0xff]
        %v646 = vld [vmem:[#allocation2 + $0x50] sm:$0xff]
        %v647 = vld [vmem:[#allocation2 + $0x58] sm:$0xff]
        %v648 = vld [vmem:[#allocation2 + $0x60] sm:$0xff]
        %v649 = vld [vmem:[#allocation2 + $0x68] sm:$0xff]
        %v650 = vld [vmem:[#allocation2 + $0x70] sm:$0xff]
        %v651 = vld [vmem:[#allocation2 + $0x78] sm:$0xff]
        %v652 = vld [vmem:[#allocation2 + $0x80] sm:$0xff]
        %v653 = vld [vmem:[#allocation2 + $0x88] sm:$0xff]
        %v654 = vld [vmem:[%s6] sm:$0xf]
        %656 = vset.pattern.permute.xlu0 0
        %657 = vperm.xlu0 %656, %v654
        %v658 = vpop.permute.xlu0 %657
        %vm660 = vcmask 588800
        %v662 = vsel %vm660, %v635, 0
        %664 = vmatprep.subr.mxu0 %v637
        %665 = vmatpush1.msra.mxu0 %v636
        %666 = vmatprep.subr.mxu0 %v639
        %667 = vmatpush1.msra.mxu0 %v638
        %668 = vmatprep.subr.mxu0 %v641
        %669 = vmatpush1.msra.mxu0 %v640
        %670 = vmatprep.subr.mxu0 %v643
        %671 = vmatpush1.msra.mxu0 %v642
        %672 = vmatprep.subr.mxu0 %v645
        %673 = vmatpush1.msra.mxu0 %v644
        %674 = vmatprep.subr.mxu0 %v647
        %675 = vmatpush1.msra.mxu0 %v646
        %676 = vmatprep.subr.mxu0 %v649
        %677 = vmatpush1.msra.mxu0 %v648
        %678 = vmatprep.subr.mxu0 %v651
        %679 = vmatpush1.msra.mxu0 %v650
        %680 = vmatprep.subr.mxu0 %v653
        %681 = vmatpush1.msra.mxu0 %v652
        %682 = vmatprep.subr.mxu0 0.0
        %683 = vmatpush1.msra.mxu0 0.0
        %684 = vmatprep.subr.mxu0 0.0
        %685 = vmatpush1.msra.mxu0 0.0
        %686 = vmatprep.subr.mxu0 0.0
        %687 = vmatpush1.msra.mxu0 0.0
        %688 = vmatprep.subr.mxu0 0.0
        %689 = vmatpush1.msra.mxu0 0.0
        %690 = vmatprep.subr.mxu0 0.0
        %691 = vmatpush1.msra.mxu0 0.0
        %692 = vmatprep.subr.mxu0 0.0
        %693 = vmatpush1.msra.mxu0 0.0
        %694 = vmatprep.subr.mxu0 0.0
        %695 = vmatpush1.msra.mxu0 0.0
        %696 = vmatprep.subr.mxu0 0.0
        %697 = vmatpush1.msra.mxu0 0.0
        %698 = vmatprep.subr.mxu0 0.0
        %699 = vmatpush1.msra.mxu0 0.0
        %700 = vmatprep.subr.mxu0 0.0
        %701 = vmatpush1.msra.mxu0 0.0
        %702 = vmatprep.subr.mxu0 0.0
        %703 = vmatpush1.msra.mxu0 0.0
        %704 = vmatprep.subr.mxu0 0.0
        %705 = vmatpush1.msra.mxu0 0.0
        %706 = vmatprep.subr.mxu0 0.0
        %707 = vmatpush1.msra.mxu0 0.0
        %708 = vmatprep.subr.mxu0 0.0
        %709 = vmatpush1.msra.mxu0 0.0
        %710 = vmatprep.subr.mxu0 0.0
        %711 = vmatpush1.msra.mxu0 0.0
        %712 = vmatprep.subr.mxu0 0.0
        %713 = vmatpush1.msra.mxu0 0.0
        %714 = vmatprep.subr.mxu0 0.0
        %715 = vmatpush1.msra.mxu0 0.0
        %716 = vmatprep.subr.mxu0 0.0
        %717 = vmatpush1.msra.mxu0 0.0
        %718 = vmatprep.subr.mxu0 0.0
        %719 = vmatpush1.msra.mxu0 0.0
        %720 = vmatprep.subr.mxu0 0.0
        %721 = vmatpush1.msra.mxu0 0.0
        %722 = vmatprep.subr.mxu0 0.0
        %723 = vmatpush1.msra.mxu0 0.0
        %724 = vmatprep.subr.mxu0 0.0
        %725 = vmatpush1.msra.mxu0 0.0
        %726 = vmatprep.subr.mxu0 0.0
        %727 = vmatpush1.msra.mxu0 0.0
        %728 = vmatprep.mubr.f32.mxu0 0.0
        %729 = vmatmul.mubr.f32.gmra.mrb[0].mxu0 %v662
        %v730 = vpop.f32.mrb[0].mxu0
        %v731 = vadd.f32 %v658, %v730
        %v732 = vpop.f32.mrb[0].mxu0
        %v733 = vadd.f32 %v658, %v732
        %734 = vdwg.mxu0
        %v735 = vmax.f32 %v731, 0.0
        %v736 = vmax.f32 %v733, 0.0
        %737 = vrot.lane.b32.xlu0 %v735, 17
        %v738 = vpop.permute.xlu0 %737
        %739 = vrot.lane.b32.xlu0 %v736, 17
        %v740 = vpop.permute.xlu0 %739
        %v741 = vsel %vm485, %v738, %v740
        %v742 = vsel %vm485, %v740, %v738
        %v743 = vmul.f32 %v742, %v491
        %v744 = vmul.f32 %v741, %v495
        %745 = vst [vmem:[#allocation2] sm:$0xf] %v743
        %746 = vst [vmem:[#allocation2 + $0x8] sm:$0xf] %v744
        %747 = vrot.lane.b32.xlu0 %v735, 16
        %v748 = vpop.permute.xlu0 %747
        %749 = vrot.lane.b32.xlu0 %v736, 16
        %v750 = vpop.permute.xlu0 %749
        %v751 = vsel %vm504, %v748, %v750
        %v752 = vsel %vm504, %v750, %v748
        %v753 = vmul.f32 %v752, %v510
        %v754 = vmul.f32 %v751, %v514
        %v757 = vrot.slane %v753, 4
        %v758 = vrot.slane %v754, 4
        %761 = vst [vmem:[#allocation2] sm:$0xf0] %v757
        %762 = vst [vmem:[#allocation2 + $0x8] sm:$0xf0] %v758
        %763 = vrot.lane.b32.xlu0 %v735, 15
        %v764 = vpop.permute.xlu0 %763
        %765 = vrot.lane.b32.xlu0 %v736, 15
        %v766 = vpop.permute.xlu0 %765
        %v767 = vsel %vm523, %v764, %v766
        %v768 = vsel %vm523, %v766, %v764
        %v769 = vmul.f32 %v768, %v529
        %v770 = vmul.f32 %v767, %v533
        %771 = vst [vmem:[#allocation2 + $0x10] sm:$0xf] %v769
        %772 = vst [vmem:[#allocation2 + $0x18] sm:$0xf] %v770
        %773 = vrot.lane.b32.xlu0 %v735, 1
        %v774 = vpop.permute.xlu0 %773
        %775 = vrot.lane.b32.xlu0 %v736, 1
        %v776 = vpop.permute.xlu0 %775
        %v777 = vsel %vm542, %v774, %v776
        %v778 = vsel %vm542, %v776, %v774
        %v779 = vmul.f32 %v778, %v548
        %v780 = vmul.f32 %v777, %v552
        %v783 = vrot.slane %v779, 4
        %v784 = vrot.slane %v780, 4
        %787 = vst [vmem:[#allocation2 + $0x10] sm:$0xf0] %v783
        %788 = vst [vmem:[#allocation2 + $0x18] sm:$0xf0] %v784
        %789 = vst [vmem:[#allocation2 + $0x20] sm:$0xf] %v735
        %790 = vst [vmem:[#allocation2 + $0x28] sm:$0xf] %v736
        %791 = vrot.lane.b32.xlu0 %v735, 127
        %v792 = vpop.permute.xlu0 %791
        %793 = vrot.lane.b32.xlu0 %v736, 127
        %v794 = vpop.permute.xlu0 %793
        %v795 = vsel %vm563, %v792, %v794
        %v796 = vsel %vm563, %v794, %v792
        %v797 = vmul.f32 %v795, %v569
        %v798 = vmul.f32 %v796, %v573
        %v801 = vrot.slane %v797, 4
        %v802 = vrot.slane %v798, 4
        %805 = vst [vmem:[#allocation2 + $0x20] sm:$0xf0] %v801
        %806 = vst [vmem:[#allocation2 + $0x28] sm:$0xf0] %v802
        %807 = vrot.lane.b32.xlu0 %v735, 113
        %v808 = vpop.permute.xlu0 %807
        %809 = vrot.lane.b32.xlu0 %v736, 113
        %v810 = vpop.permute.xlu0 %809
        %v811 = vsel %vm582, %v808, %v810
        %v812 = vsel %vm582, %v810, %v808
        %v813 = vmul.f32 %v811, %v588
        %v814 = vmul.f32 %v812, %v592
        %815 = vst [vmem:[#allocation2 + $0x30] sm:$0xf] %v813
        %816 = vst [vmem:[#allocation2 + $0x38] sm:$0xf] %v814
        %817 = vrot.lane.b32.xlu0 %v735, 112
        %v818 = vpop.permute.xlu0 %817
        %819 = vrot.lane.b32.xlu0 %v736, 112
        %v820 = vpop.permute.xlu0 %819
        %v821 = vsel %vm601, %v818, %v820
        %v822 = vsel %vm601, %v820, %v818
        %v823 = vmul.f32 %v821, %v607
        %v824 = vmul.f32 %v822, %v611
        %v827 = vrot.slane %v823, 4
        %v828 = vrot.slane %v824, 4
        %831 = vst [vmem:[#allocation2 + $0x30] sm:$0xf0] %v827
        %832 = vst [vmem:[#allocation2 + $0x38] sm:$0xf0] %v828
        %833 = vrot.lane.b32.xlu0 %v735, 111
        %v834 = vpop.permute.xlu0 %833
        %835 = vrot.lane.b32.xlu0 %v736, 111
        %v836 = vpop.permute.xlu0 %835
        %v837 = vsel %vm620, %v834, %v836
        %v838 = vsel %vm620, %v836, %v834
        %v839 = vmul.f32 %v837, %v626
        %v840 = vmul.f32 %v838, %v630
        %841 = vst [vmem:[#allocation2 + $0x40] sm:$0xf] %v839
        %842 = vst [vmem:[#allocation2 + $0x48] sm:$0xf] %v840
        %v843 = vld [vmem:[%s5] sm:$0xf]
        %v844 = vld [vmem:[#allocation2] sm:$0xff]
        %v845 = vld [vmem:[#allocation2 + $0x8] sm:$0xff]
        %v846 = vld [vmem:[#allocation2 + $0x10] sm:$0xff]
        %v847 = vld [vmem:[#allocation2 + $0x18] sm:$0xff]
        %v848 = vld [vmem:[#allocation2 + $0x20] sm:$0xff]
        %v849 = vld [vmem:[#allocation2 + $0x28] sm:$0xff]
        %v850 = vld [vmem:[#allocation2 + $0x30] sm:$0xff]
        %v851 = vld [vmem:[#allocation2 + $0x38] sm:$0xff]
        %v852 = vld [vmem:[#allocation2 + $0x40] sm:$0xf]
        %v853 = vld [vmem:[#allocation2 + $0x48] sm:$0xf]
        %v854 = vld [vmem:[%s7] sm:$0xf]
        %856 = vset.pattern.permute.xlu0 0
        %857 = vperm.xlu0 %856, %v854
        %v858 = vpop.permute.xlu0 %857
        %vm860 = vcmask 293888
        %v862 = vsel %vm860, %v843, 0
        %v865 = vsel %vm476, %v852, 0
        %v868 = vsel %vm476, %v853, 0
        %870 = vmatprep.subr.mxu0 %v845
        %871 = vmatpush1.msra.mxu0 %v844
        %872 = vmatprep.subr.mxu0 %v847
        %873 = vmatpush1.msra.mxu0 %v846
        %874 = vmatprep.subr.mxu0 %v849
        %875 = vmatpush1.msra.mxu0 %v848
        %876 = vmatprep.subr.mxu0 %v851
        %877 = vmatpush1.msra.mxu0 %v850
        %878 = vmatprep.subr.mxu0 %v868
        %879 = vmatpush1.msra.mxu0 %v865
        %880 = vmatprep.subr.mxu0 0.0
        %881 = vmatpush1.msra.mxu0 0.0
        %882 = vmatprep.subr.mxu0 0.0
        %883 = vmatpush1.msra.mxu0 0.0
        %884 = vmatprep.subr.mxu0 0.0
        %885 = vmatpush1.msra.mxu0 0.0
        %886 = vmatprep.subr.mxu0 0.0
        %887 = vmatpush1.msra.mxu0 0.0
        %888 = vmatprep.subr.mxu0 0.0
        %889 = vmatpush1.msra.mxu0 0.0
        %890 = vmatprep.subr.mxu0 0.0
        %891 = vmatpush1.msra.mxu0 0.0
        %892 = vmatprep.subr.mxu0 0.0
        %893 = vmatpush1.msra.mxu0 0.0
        %894 = vmatprep.subr.mxu0 0.0
        %895 = vmatpush1.msra.mxu0 0.0
        %896 = vmatprep.subr.mxu0 0.0
        %897 = vmatpush1.msra.mxu0 0.0
        %898 = vmatprep.subr.mxu0 0.0
        %899 = vmatpush1.msra.mxu0 0.0
        %900 = vmatprep.subr.mxu0 0.0
        %901 = vmatpush1.msra.mxu0 0.0
        %902 = vmatprep.subr.mxu0 0.0
        %903 = vmatpush1.msra.mxu0 0.0
        %904 = vmatprep.subr.mxu0 0.0
        %905 = vmatpush1.msra.mxu0 0.0
        %906 = vmatprep.subr.mxu0 0.0
        %907 = vmatpush1.msra.mxu0 0.0
        %908 = vmatprep.subr.mxu0 0.0
        %909 = vmatpush1.msra.mxu0 0.0
        %910 = vmatprep.subr.mxu0 0.0
        %911 = vmatpush1.msra.mxu0 0.0
        %912 = vmatprep.subr.mxu0 0.0
        %913 = vmatpush1.msra.mxu0 0.0
        %914 = vmatprep.subr.mxu0 0.0
        %915 = vmatpush1.msra.mxu0 0.0
        %916 = vmatprep.subr.mxu0 0.0
        %917 = vmatpush1.msra.mxu0 0.0
        %918 = vmatprep.subr.mxu0 0.0
        %919 = vmatpush1.msra.mxu0 0.0
        %920 = vmatprep.subr.mxu0 0.0
        %921 = vmatpush1.msra.mxu0 0.0
        %922 = vmatprep.subr.mxu0 0.0
        %923 = vmatpush1.msra.mxu0 0.0
        %924 = vmatprep.subr.mxu0 0.0
        %925 = vmatpush1.msra.mxu0 0.0
        %926 = vmatprep.subr.mxu0 0.0
        %927 = vmatpush1.msra.mxu0 0.0
        %928 = vmatprep.subr.mxu0 0.0
        %929 = vmatpush1.msra.mxu0 0.0
        %930 = vmatprep.subr.mxu0 0.0
        %931 = vmatpush1.msra.mxu0 0.0
        %932 = vmatprep.subr.mxu0 0.0
        %933 = vmatpush1.msra.mxu0 0.0
        %934 = vmatprep.mubr.f32.mxu0 0.0
        %935 = vmatmul.mubr.f32.gmra.mrb[0].mxu0 %v862
        %v936 = vpop.f32.mrb[0].mxu0
        %v937 = vadd.f32 %v858, %v936
        %v938 = vpop.f32.mrb[0].mxu0
        %v939 = vadd.f32 %v858, %v938
        %940 = vdwg.mxu0
        %v941 = vmax.f32 %v937, 0.0
        %v942 = vmax.f32 %v939, 0.0
        %v945 = vcombine.low %v941, %v942
        %947 = vst [vmem:[%s363] sm:$0xff] %v945
        %s948 = sand.u32 %s212, 1
        %s949 = scalar_lea.sflag [#allocation5], %s948
        %s950 = sand.u32 %s212, 1
        %s951 = smul.addr %s950, 8
        %s952 = scalar_lea.vmem [#allocation9], %s951
        // Predicated region
        $region65: #{tpu_custom_call.1} parent=51 // pred_check
          %p953 = pneg %p222
        $region66: #{tpu_custom_call.1} parent=51 // pred_check_branch
          %955 = sbr.rel (%p953) target = $region68
        $region67: #{tpu_custom_call.1} parent=51 // pred_region
          %s956 = smul.u32 2, %s26
          %s958 = ssub.s32 128, 128
          %959 = vsyncadd %s949, %s958
          %s960 = smul.addr %s956, 64
          %s961 = scalar_lea.hbm %s8, %s960
          %s963 = sshll.u32 %s952, 4
          %s964 = int_to_ptr.vmem [resolvable:$true] %s963
          %966 = dma.vmem_to_hbm [thread:$0]  %s964, 128, %s961, %s949
        $region68: #{tpu_custom_call.1} parent=51 // pred_fallthru
          _
      $region52: #{tpu_custom_call.1} parent=5 // pred_fallthru
        _
      %p967 = scmp.le.s32.totalorder 2, %s21
      // Predicated region
      $region69: #{tpu_custom_call.1} parent=5 // pred_check
        %p968 = pneg %p967
      $region70: #{tpu_custom_call.1} parent=5 // pred_check_branch
        %970 = sbr.rel (%p968) target = $region72
      $region71: #{tpu_custom_call.1} parent=5 // pred_region
        %s971 = ssub.s32 %s21, 2
        // Predicated region
        $region73: #{tpu_custom_call.1} parent=71 // pred_check
          %p972 = pneg %p228
        $region74: #{tpu_custom_call.1} parent=71 // pred_check_branch
          %974 = sbr.rel (%p972) target = $region76
        $region75: #{tpu_custom_call.1} parent=71 // pred_region
          %s975 = sand.u32 %s213, 1
          %s976 = scalar_lea.sflag [#allocation5], %s975
          %s977 = sand.u32 %s213, 1
          %s978 = smul.addr %s977, 8
          %s979 = scalar_lea.vmem [#allocation9], %s978
          %980 = dma.done %s976, 128
        $region76: #{tpu_custom_call.1} parent=71 // pred_fallthru
          _
      $region72: #{tpu_custom_call.1} parent=5 // pred_fallthru
        _
    $region6: #{tpu_custom_call.1} parent=1 // loop_footer
      %s25 = sadd.s32 1, %s21
    $region7: #{tpu_custom_call.1} parent=1 // loop_footer_branch
      %20 = sbr.rel target = $region3
    $region8: #{tpu_custom_call.1} parent=1 // loop_exit
      _
    %981 = vsyncpa [#allocation4], 1
    %s982 = scalar_lea.sflag [#allocation4], 1
    %983 = vsyncpa %s982, 1
    %984 = vsyncpa [#allocation7], 1
    %985 = vsyncpa [#allocation5], 1
    %s986 = scalar_lea.sflag [#allocation5], 1
    %987 = vsyncpa %s986, 1

// kernel: tpu_custom_call.1
$region0: #{tpu_custom_call.1}
  #allocation0 [shape = 'u32[]', space=smem, size = 0x4, offset = 0x4, fixed_abs, tag = 'smem constant byte address 0x4 - core index']
  #allocation1 [shape = 'u32[144,128]{1,0:T(1,128)}', space=vmem, size = 0x12000, scoped, tag = 'internal scratch']
  #allocation2 [shape = 'f32[72,256]{1,0:T(8,128)}', space=vmem, size = 0x12000, scoped, tag = 'scratch operand']
  %s0 = inlined_call_operand.vmem [shape: f32[2,4,64], index: 0, kind: input, shape index: {}]
  %s1 = inlined_call_operand.hbm [shape: f32[4,512], index: 1, kind: input, shape index: {}]
  %s2 = inlined_call_operand.hbm [shape: f32[64,256], index: 2, kind: input, shape index: {}]
  %s3 = inlined_call_operand.hbm [shape: f32[9,256], index: 3, kind: input, shape index: {}]
  %s4 = inlined_call_operand.vmem [shape: f32[4,72], index: 4, kind: input, shape index: {}]
  %s5 = inlined_call_operand.vmem [shape: f32[4,36], index: 5, kind: input, shape index: {}]
  %s6 = inlined_call_operand.vmem [shape: f32[4,1], index: 6, kind: input, shape index: {}]
  %s7 = inlined_call_operand.vmem [shape: f32[4,1], index: 7, kind: input, shape index: {}]
  %s8 = inlined_call_operand.hbm [shape: f32[4,512], index: 8, kind: output, shape index: {}]
  %s9 = sld [smem:[#allocation0]]
  $region77: #{tpu_custom_call.1} parent=0
    _
  %s11 = ssub.s32 1, %s9
  %s12 = scalar_select 0, %s11, %s9
  $region1: #{tpu_custom_call.1} parent=0
    #allocation3 [shape = 'u8[8192]{0}', space=vmem, size = 0x2000, scoped, tag = 'input window, operand 1']
    #allocation4 [shape = 's32[2]{0}', space=sflag, size = 0x8, scoped, tag = 'scoped memory for tpu_custom_call.1']
    #allocation5 [shape = 's32[2]{0}', space=sflag, size = 0x8, scoped, tag = 'scoped memory for tpu_custom_call.1']
    #allocation6 [shape = 'u8[65536]{0}', space=vmem, size = 0x10000, scoped, tag = 'input window, operand 2, single buffered']
    #allocation7 [shape = 's32[1]{0}', space=sflag, size = 0x4, scoped, tag = 'scoped memory for tpu_custom_call.1']
    #allocation8 [shape = 'u8[16384]{0}', space=vmem, size = 0x4000, scoped, tag = 'input window, operand 3, single buffered']
    #allocation9 [shape = 'u8[8192]{0}', space=vmem, size = 0x2000, scoped, tag = 'output window, operand 0']
    %13 = vsyncpa [#allocation4], 0
    %s14 = scalar_lea.sflag [#allocation4], 1
    %15 = vsyncpa %s14, 0
    %16 = vsyncpa [#allocation7], 0
    %17 = vsyncpa [#allocation5], 0
    %s18 = scalar_lea.sflag [#allocation5], 1
    %19 = vsyncpa %s18, 0
    loop: start=0, step=1, limit=4
    $region2: #{tpu_custom_call.1} parent=1 // loop_pre_header
      _
    $region3: #{tpu_custom_call.1} parent=1 // loop_header
      %s21 = sphi 0, %s25
      %p22 = scmp.ge.s32.totalorder %s21, 4
      %s31 = sphi 0, %s33
      %s34 = sphi 0, %s31
      %s35 = sphi 0, %s34
      %s51 = sphi 0, %s35
      %s57 = sphi 0, %s59
      %s60 = sphi 0, %s57
      %s61 = sphi 0, %s60
      %s77 = sphi 0, %s61
      %s81 = sphi 0, %s81
      %s83 = sphi 0, %s81
      %s84 = sphi 0, %s83
      %s98 = sphi 0, %s84
      %s102 = sphi 0, %s102
      %s104 = sphi 0, %s102
      %s105 = sphi 0, %s104
      %s119 = sphi 0, %s105
      %s123 = sphi 0, %s123
      %s125 = sphi 0, %s123
      %s126 = sphi 0, %s125
      %s140 = sphi 0, %s126
      %s144 = sphi 0, %s144
      %s146 = sphi 0, %s144
      %s147 = sphi 0, %s146
      %s161 = sphi 0, %s147
      %s165 = sphi 0, %s165
      %s167 = sphi 0, %s165
      %s168 = sphi 0, %s167
      %s182 = sphi 0, %s168
      %s186 = sphi 0, %s186
      %s188 = sphi 0, %s186
      %s189 = sphi 0, %s188
      %s203 = sphi 0, %s189
      %s209 = sphi 0, %s211
      %s212 = sphi 0, %s209
      %s213 = sphi 0, %s212
      %s229 = sphi 0, %s213
    $region4: #{tpu_custom_call.1} parent=1 // loop_header_branch
      %24 = sbr.rel (%p22) target = $region8
    $region5: #{tpu_custom_call.1} parent=1 // loop_body
      %s26 = ssub.s32 %s21, 1
      %s27 = ssub.s32 %s21, 2
      %s28 = sadd.s32 %s21, 1
      %s29 = ssub.s32 %s21, %s28
      %p30 = scmp.eq.s32.totalorder %s29, 0
      %s32 = sadd.s32 %s31, 1
      %s33 = scalar_select %p30, %s31, %s32
      %p36 = pneg %p30
      %p37 = scmp.eq.s32.totalorder %s21, 1
      %p38 = por %p36, %p37
      %p39 = scmp.ne.s32.totalorder %s31, %s34
      %p40 = scmp.eq.s32.totalorder %s21, 0
      %p41 = por %p39, %p40
      %p42 = scmp.ne.s32.totalorder %s31, %s34
      %p43 = scmp.eq.s32.totalorder %s26, 1
      %p44 = por %p42, %p43
      %p45 = scmp.ne.s32.totalorder %s34, %s35
      %p46 = scmp.eq.s32.totalorder %s26, 0
      %p47 = por %p45, %p46
      %p48 = scmp.ne.s32.totalorder %s34, %s35
      %p49 = scmp.eq.s32.totalorder %s27, 1
      %p50 = por %p48, %p49
      %p52 = scmp.ne.s32.totalorder %s35, %s51
      %p53 = scmp.eq.s32.totalorder %s27, 0
      %p54 = por %p52, %p53
      %s55 = ssub.s32 %s21, %s28
      %p56 = scmp.eq.s32.totalorder %s55, 0
      %s58 = sadd.s32 %s57, 1
      %s59 = scalar_select %p56, %s57, %s58
      %p62 = pneg %p56
      %p63 = scmp.eq.s32.totalorder %s21, 1
      %p64 = por %p62, %p63
      %p65 = scmp.ne.s32.totalorder %s57, %s60
      %p66 = scmp.eq.s32.totalorder %s21, 0
      %p67 = por %p65, %p66
      %p68 = scmp.ne.s32.totalorder %s57, %s60
      %p69 = scmp.eq.s32.totalorder %s26, 1
      %p70 = por %p68, %p69
      %p71 = scmp.ne.s32.totalorder %s60, %s61
      %p72 = scmp.eq.s32.totalorder %s26, 0
      %p73 = por %p71, %p72
      %p74 = scmp.ne.s32.totalorder %s60, %s61
      %p75 = scmp.eq.s32.totalorder %s27, 1
      %p76 = por %p74, %p75
      %p78 = scmp.ne.s32.totalorder %s61, %s77
      %p79 = scmp.eq.s32.totalorder %s27, 0
      %p80 = por %p78, %p79
      %s82 = sadd.s32 %s81, 1
      %p85 = scmp.eq.s32.totalorder %s21, 1
      %p86 = scmp.ne.s32.totalorder %s81, %s83
      %p87 = scmp.eq.s32.totalorder %s21, 0
      %p88 = por %p86, %p87
      %p89 = scmp.ne.s32.totalorder %s81, %s83
      %p90 = scmp.eq.s32.totalorder %s26, 1
      %p91 = por %p89, %p90
      %p92 = scmp.ne.s32.totalorder %s83, %s84
      %p93 = scmp.eq.s32.totalorder %s26, 0
      %p94 = por %p92, %p93
      %p95 = scmp.ne.s32.totalorder %s83, %s84
      %p96 = scmp.eq.s32.totalorder %s27, 1
      %p97 = por %p95, %p96
      %p99 = scmp.ne.s32.totalorder %s84, %s98
      %p100 = scmp.eq.s32.totalorder %s27, 0
      %p101 = por %p99, %p100
      %s103 = sadd.s32 %s102, 1
      %p106 = scmp.eq.s32.totalorder %s21, 1
      %p107 = scmp.ne.s32.totalorder %s102, %s104
      %p108 = scmp.eq.s32.totalorder %s21, 0
      %p109 = por %p107, %p108
      %p110 = scmp.ne.s32.totalorder %s102, %s104
      %p111 = scmp.eq.s32.totalorder %s26, 1
      %p112 = por %p110, %p111
      %p113 = scmp.ne.s32.totalorder %s104, %s105
      %p114 = scmp.eq.s32.totalorder %s26, 0
      %p115 = por %p113, %p114
      %p116 = scmp.ne.s32.totalorder %s104, %s105
      %p117 = scmp.eq.s32.totalorder %s27, 1
      %p118 = por %p116, %p117
      %p120 = scmp.ne.s32.totalorder %s105, %s119
      %p121 = scmp.eq.s32.totalorder %s27, 0
      %p122 = por %p120, %p121
      %s124 = sadd.s32 %s123, 1
      %p127 = scmp.eq.s32.totalorder %s21, 1
      %p128 = scmp.ne.s32.totalorder %s123, %s125
      %p129 = scmp.eq.s32.totalorder %s21, 0
      %p130 = por %p128, %p129
      %p131 = scmp.ne.s32.totalorder %s123, %s125
      %p132 = scmp.eq.s32.totalorder %s26, 1
      %p133 = por %p131, %p132
      %p134 = scmp.ne.s32.totalorder %s125, %s126
      %p135 = scmp.eq.s32.totalorder %s26, 0
      %p136 = por %p134, %p135
      %p137 = scmp.ne.s32.totalorder %s125, %s126
      %p138 = scmp.eq.s32.totalorder %s27, 1
      %p139 = por %p137, %p138
      %p141 = scmp.ne.s32.totalorder %s126, %s140
      %p142 = scmp.eq.s32.totalorder %s27, 0
      %p143 = por %p141, %p142
      %s145 = sadd.s32 %s144, 1
      %p148 = scmp.eq.s32.totalorder %s21, 1
      %p149 = scmp.ne.s32.totalorder %s144, %s146
      %p150 = scmp.eq.s32.totalorder %s21, 0
      %p151 = por %p149, %p150
      %p152 = scmp.ne.s32.totalorder %s144, %s146
      %p153 = scmp.eq.s32.totalorder %s26, 1
      %p154 = por %p152, %p153
      %p155 = scmp.ne.s32.totalorder %s146, %s147
      %p156 = scmp.eq.s32.totalorder %s26, 0
      %p157 = por %p155, %p156
      %p158 = scmp.ne.s32.totalorder %s146, %s147
      %p159 = scmp.eq.s32.totalorder %s27, 1
      %p160 = por %p158, %p159
      %p162 = scmp.ne.s32.totalorder %s147, %s161
      %p163 = scmp.eq.s32.totalorder %s27, 0
      %p164 = por %p162, %p163
      %s166 = sadd.s32 %s165, 1
      %p169 = scmp.eq.s32.totalorder %s21, 1
      %p170 = scmp.ne.s32.totalorder %s165, %s167
      %p171 = scmp.eq.s32.totalorder %s21, 0
      %p172 = por %p170, %p171
      %p173 = scmp.ne.s32.totalorder %s165, %s167
      %p174 = scmp.eq.s32.totalorder %s26, 1
      %p175 = por %p173, %p174
      %p176 = scmp.ne.s32.totalorder %s167, %s168
      %p177 = scmp.eq.s32.totalorder %s26, 0
      %p178 = por %p176, %p177
      %p179 = scmp.ne.s32.totalorder %s167, %s168
      %p180 = scmp.eq.s32.totalorder %s27, 1
      %p181 = por %p179, %p180
      %p183 = scmp.ne.s32.totalorder %s168, %s182
      %p184 = scmp.eq.s32.totalorder %s27, 0
      %p185 = por %p183, %p184
      %s187 = sadd.s32 %s186, 1
      %p190 = scmp.eq.s32.totalorder %s21, 1
      %p191 = scmp.ne.s32.totalorder %s186, %s188
      %p192 = scmp.eq.s32.totalorder %s21, 0
      %p193 = por %p191, %p192
      %p194 = scmp.ne.s32.totalorder %s186, %s188
      %p195 = scmp.eq.s32.totalorder %s26, 1
      %p196 = por %p194, %p195
      %p197 = scmp.ne.s32.totalorder %s188, %s189
      %p198 = scmp.eq.s32.totalorder %s26, 0
      %p199 = por %p197, %p198
      %p200 = scmp.ne.s32.totalorder %s188, %s189
      %p201 = scmp.eq.s32.totalorder %s27, 1
      %p202 = por %p200, %p201
      %p204 = scmp.ne.s32.totalorder %s189, %s203
      %p205 = scmp.eq.s32.totalorder %s27, 0
      %p206 = por %p204, %p205
      %s207 = ssub.s32 %s21, %s28
      %p208 = scmp.eq.s32.totalorder %s207, 0
      %s210 = sadd.s32 %s209, 1
      %s211 = scalar_select %p208, %s209, %s210
      %p214 = pneg %p208
      %p215 = scmp.eq.s32.totalorder %s21, 1
      %p216 = por %p214, %p215
      %p217 = scmp.ne.s32.totalorder %s209, %s212
      %p218 = scmp.eq.s32.totalorder %s21, 0
      %p219 = por %p217, %p218
      %p220 = scmp.ne.s32.totalorder %s209, %s212
      %p221 = scmp.eq.s32.totalorder %s26, 1
      %p222 = por %p220, %p221
      %p223 = scmp.ne.s32.totalorder %s212, %s213
      %p224 = scmp.eq.s32.totalorder %s26, 0
      %p225 = por %p223, %p224
      %p226 = scmp.ne.s32.totalorder %s212, %s213
      %p227 = scmp.eq.s32.totalorder %s27, 1
      %p228 = por %p226, %p227
      %p230 = scmp.ne.s32.totalorder %s213, %s229
      %p231 = scmp.eq.s32.totalorder %s27, 0
      %p232 = por %p230, %p231
      %p233 = scmp.le.s32.totalorder 1, %s21
      %p234 = scmp.lt.s32.totalorder %s21, 3
      %p235 = pnand %p233, %p234
      %p236 = pneg %p235
      // Predicated region
      $region9: #{tpu_custom_call.1} parent=5 // pred_check
        _
      $region10: #{tpu_custom_call.1} parent=5 // pred_check_branch
        %238 = sbr.rel (%p235) target = $region12
      $region11: #{tpu_custom_call.1} parent=5 // pred_region
        %s239 = ssub.s32 %s21, 1
        // Predicated region
        $region13: #{tpu_custom_call.1} parent=11 // pred_check
          %p240 = pneg %p94
        $region14: #{tpu_custom_call.1} parent=11 // pred_check_branch
          %242 = sbr.rel (%p240) target = $region16
        $region15: #{tpu_custom_call.1} parent=11 // pred_region
          %s244 = ssub.s32 2048, 2048
          %245 = vsyncadd [#allocation7], %s244
          %s246 = sshll.u32 [#allocation6], 4
          %s247 = int_to_ptr.vmem [resolvable:$true] %s246
          %252 = dma.hbm_to_vmem [thread:$0]  %s2, 2048, %s247, [#allocation7], 256, 256, 16
        $region16: #{tpu_custom_call.1} parent=11 // pred_fallthru
          _
        // Predicated region
        $region17: #{tpu_custom_call.1} parent=11 // pred_check
          %p253 = pneg %p115
        $region18: #{tpu_custom_call.1} parent=11 // pred_check_branch
          %255 = sbr.rel (%p253) target = $region20
        $region19: #{tpu_custom_call.1} parent=11 // pred_region
          %s257 = ssub.s32 512, 512
          %258 = vsyncadd [#allocation7], %s257
          %s259 = sshll.u32 [#allocation8], 4
          %s260 = int_to_ptr.vmem [resolvable:$true] %s259
          %265 = dma.hbm_to_vmem [thread:$0]  %s3, 512, %s260, [#allocation7], 256, 256, 16
        $region20: #{tpu_custom_call.1} parent=11 // pred_fallthru
          _
        // Predicated region
        $region21: #{tpu_custom_call.1} parent=11 // pred_check
          %p266 = pneg %p136
        $region22: #{tpu_custom_call.1} parent=11 // pred_check_branch
          %268 = sbr.rel (%p266) target = $region24
        $region23: #{tpu_custom_call.1} parent=11 // pred_region
          _
        $region24: #{tpu_custom_call.1} parent=11 // pred_fallthru
          _
        // Predicated region
        $region25: #{tpu_custom_call.1} parent=11 // pred_check
          %p269 = pneg %p157
        $region26: #{tpu_custom_call.1} parent=11 // pred_check_branch
          %271 = sbr.rel (%p269) target = $region28
        $region27: #{tpu_custom_call.1} parent=11 // pred_region
          _
        $region28: #{tpu_custom_call.1} parent=11 // pred_fallthru
          _
        // Predicated region
        $region29: #{tpu_custom_call.1} parent=11 // pred_check
          %p272 = pneg %p178
        $region30: #{tpu_custom_call.1} parent=11 // pred_check_branch
          %274 = sbr.rel (%p272) target = $region32
        $region31: #{tpu_custom_call.1} parent=11 // pred_region
          _
        $region32: #{tpu_custom_call.1} parent=11 // pred_fallthru
          _
        // Predicated region
        $region33: #{tpu_custom_call.1} parent=11 // pred_check
          %p275 = pneg %p199
        $region34: #{tpu_custom_call.1} parent=11 // pred_check_branch
          %277 = sbr.rel (%p275) target = $region36
        $region35: #{tpu_custom_call.1} parent=11 // pred_region
          _
        $region36: #{tpu_custom_call.1} parent=11 // pred_fallthru
          _
      $region12: #{tpu_custom_call.1} parent=5 // pred_fallthru
        _
      %p278 = scmp.lt.s32.totalorder %s21, 2
      // Predicated region
      $region37: #{tpu_custom_call.1} parent=5 // pred_check
        %p279 = pneg %p278
      $region38: #{tpu_custom_call.1} parent=5 // pred_check_branch
        %281 = sbr.rel (%p279) target = $region40
      $region39: #{tpu_custom_call.1} parent=5 // pred_region
        // Predicated region
        $region41: #{tpu_custom_call.1} parent=39 // pred_check
          %p282 = pneg %p41
        $region42: #{tpu_custom_call.1} parent=39 // pred_check_branch
          %284 = sbr.rel (%p282) target = $region44
        $region43: #{tpu_custom_call.1} parent=39 // pred_region
          %p285 = scmp.lt.s32.totalorder %s21, 1
          %s286 = scalar_select %p285, %s21, 1
          %s287 = smul.addr %s286, 4
          %s288 = scalar_lea.vmem %s0, %s287
        $region44: #{tpu_custom_call.1} parent=39 // pred_fallthru
          _
        // Predicated region
        $region45: #{tpu_custom_call.1} parent=39 // pred_check
          %p289 = pneg %p67
        $region46: #{tpu_custom_call.1} parent=39 // pred_check_branch
          %291 = sbr.rel (%p289) target = $region48
        $region47: #{tpu_custom_call.1} parent=39 // pred_region
          %s292 = sand.u32 %s57, 1
          %s293 = scalar_lea.sflag [#allocation4], %s292
          %s294 = sand.u32 %s57, 1
          %s295 = smul.addr %s294, 8
          %s296 = scalar_lea.vmem [#allocation3], %s295
          %s297 = smul.u32 2, %s21
          %s299 = ssub.s32 128, 128
          %300 = vsyncadd %s293, %s299
          %s301 = smul.addr %s297, 64
          %s302 = scalar_lea.hbm %s1, %s301
          %s304 = sshll.u32 %s296, 4
          %s305 = int_to_ptr.vmem [resolvable:$true] %s304
          %307 = dma.hbm_to_vmem [thread:$0]  %s302, 128, %s305, %s293
        $region48: #{tpu_custom_call.1} parent=39 // pred_fallthru
          _
      $region40: #{tpu_custom_call.1} parent=5 // pred_fallthru
        _
      %p308 = scmp.le.s32.totalorder 1, %s21
      %p309 = scmp.lt.s32.totalorder %s21, 3
      %p310 = pnand %p308, %p309
      %p311 = pneg %p310
      // Predicated region
      $region49: #{tpu_custom_call.1} parent=5 // pred_check
        _
      $region50: #{tpu_custom_call.1} parent=5 // pred_check_branch
        %313 = sbr.rel (%p310) target = $region52
      $region51: #{tpu_custom_call.1} parent=5 // pred_region
        %s314 = ssub.s32 %s21, 1
        %s315 = sand.u32 %s60, 1
        %s316 = scalar_lea.sflag [#allocation4], %s315
        %s317 = sand.u32 %s60, 1
        %s318 = smul.addr %s317, 8
        %s319 = scalar_lea.vmem [#allocation3], %s318
        // Predicated region
        $region53: #{tpu_custom_call.1} parent=51 // pred_check
          %p320 = pneg %p73
        $region54: #{tpu_custom_call.1} parent=51 // pred_check_branch
          %322 = sbr.rel (%p320) target = $region56
        $region55: #{tpu_custom_call.1} parent=51 // pred_region
          %323 = dma.done %s316, 128
        $region56: #{tpu_custom_call.1} parent=51 // pred_fallthru
          _
        // Predicated region
        $region57: #{tpu_custom_call.1} parent=51 // pred_check
          %p324 = pneg %p94
        $region58: #{tpu_custom_call.1} parent=51 // pred_check_branch
          %326 = sbr.rel (%p324) target = $region60
        $region59: #{tpu_custom_call.1} parent=51 // pred_region
          %327 = dma.done [#allocation7], 2048
        $region60: #{tpu_custom_call.1} parent=51 // pred_fallthru
          _
        // Predicated region
        $region61: #{tpu_custom_call.1} parent=51 // pred_check
          %p328 = pneg %p115
        $region62: #{tpu_custom_call.1} parent=51 // pred_check_branch
          %330 = sbr.rel (%p328) target = $region64
        $region63: #{tpu_custom_call.1} parent=51 // pred_region
          %331 = dma.done [#allocation7], 512
        $region64: #{tpu_custom_call.1} parent=51 // pred_fallthru
          _
        %p332 = scmp.lt.s32.totalorder %s26, 1
        %s333 = scalar_select %p332, %s26, 1
        %s334 = smul.addr %s333, 4
        %s335 = scalar_lea.vmem %s0, %s334
        %p336 = pneg %p47
        %p337 = pneg %p44
        %s338 = sand.u32 %s60, 1
        %s339 = scalar_lea.sflag [#allocation4], %s338
        %s340 = sand.u32 %s60, 1
        %s341 = smul.addr %s340, 8
        %s342 = scalar_lea.vmem [#allocation3], %s341
        %p343 = pneg %p73
        %p344 = pneg %p70
        %p345 = pneg %p94
        %p346 = pneg %p91
        %p347 = pneg %p115
        %p348 = pneg %p112
        %p349 = pneg %p136
        %p350 = pneg %p133
        %p351 = pneg %p157
        %p352 = pneg %p154
        %p353 = pneg %p178
        %p354 = pneg %p175
        %p355 = pneg %p199
        %p356 = pneg %p196
        %p357 = pneg %p225
        %p358 = pneg %p222
        %s359 = sand.u32 %s212, 1
        %s360 = scalar_lea.sflag [#allocation5], %s359
        %s361 = sand.u32 %s212, 1
        %s362 = smul.addr %s361, 8
        %s363 = scalar_lea.vmem [#allocation9], %s362
        %p364 = scmp.lt.s32.totalorder %s26, 1
        %s365 = scalar_select %p364, %s26, 1
        %s366 = smul.addr %s365, 4
        %s367 = scalar_lea.vmem %s0, %s366
        %s368 = smul.u32 2, %s26
        %s369 = smul.u32 2, %s26
        %v370 = vld [vmem:[#allocation8] sm:$0xff]
        %v371 = vld [vmem:[#allocation8 + $0x8] sm:$0xff]
        %v372 = vld [vmem:[#allocation8 + $0x10] sm:$0x1]
        %v373 = vld [vmem:[#allocation8 + $0x18] sm:$0x1]
        %v374 = vld [vmem:[#allocation6] sm:$0xff]
        %v375 = vld [vmem:[#allocation6 + $0x8] sm:$0xff]
        %v376 = vld [vmem:[#allocation6 + $0x10] sm:$0xff]
        %v377 = vld [vmem:[#allocation6 + $0x18] sm:$0xff]
        %v378 = vld [vmem:[#allocation6 + $0x20] sm:$0xff]
        %v379 = vld [vmem:[#allocation6 + $0x28] sm:$0xff]
        %v380 = vld [vmem:[#allocation6 + $0x30] sm:$0xff]
        %v381 = vld [vmem:[#allocation6 + $0x38] sm:$0xff]
        %v382 = vld [vmem:[#allocation6 + $0x40] sm:$0xff]
        %v383 = vld [vmem:[#allocation6 + $0x48] sm:$0xff]
        %v384 = vld [vmem:[#allocation6 + $0x50] sm:$0xff]
        %v385 = vld [vmem:[#allocation6 + $0x58] sm:$0xff]
        %v386 = vld [vmem:[#allocation6 + $0x60] sm:$0xff]
        %v387 = vld [vmem:[#allocation6 + $0x68] sm:$0xff]
        %v388 = vld [vmem:[#allocation6 + $0x70] sm:$0xff]
        %v389 = vld [vmem:[#allocation6 + $0x78] sm:$0xff]
        %v390 = vld [vmem:[%s367] sm:$0xf]
        %vm391 = vcmask 523264
        %v393 = vsel %vm391, %v390, 0
        %395 = vmatprep.subr.mxu0 %v375
        %396 = vmatpush1.msra.mxu0 %v374
        %397 = vmatprep.subr.mxu0 %v377
        %398 = vmatpush1.msra.mxu0 %v376
        %399 = vmatprep.subr.mxu0 %v379
        %400 = vmatpush1.msra.mxu0 %v378
        %401 = vmatprep.subr.mxu0 %v381
        %402 = vmatpush1.msra.mxu0 %v380
        %403 = vmatprep.subr.mxu0 %v383
        %404 = vmatpush1.msra.mxu0 %v382
        %405 = vmatprep.subr.mxu0 %v385
        %406 = vmatpush1.msra.mxu0 %v384
        %407 = vmatprep.subr.mxu0 %v387
        %408 = vmatpush1.msra.mxu0 %v386
        %409 = vmatprep.subr.mxu0 %v389
        %410 = vmatpush1.msra.mxu0 %v388
        %411 = vmatprep.subr.mxu0 0.0
        %412 = vmatpush1.msra.mxu0 0.0
        %413 = vmatprep.subr.mxu0 0.0
        %414 = vmatpush1.msra.mxu0 0.0
        %415 = vmatprep.subr.mxu0 0.0
        %416 = vmatpush1.msra.mxu0 0.0
        %417 = vmatprep.subr.mxu0 0.0
        %418 = vmatpush1.msra.mxu0 0.0
        %419 = vmatprep.subr.mxu0 0.0
        %420 = vmatpush1.msra.mxu0 0.0
        %421 = vmatprep.subr.mxu0 0.0
        %422 = vmatpush1.msra.mxu0 0.0
        %423 = vmatprep.subr.mxu0 0.0
        %424 = vmatpush1.msra.mxu0 0.0
        %425 = vmatprep.subr.mxu0 0.0
        %426 = vmatpush1.msra.mxu0 0.0
        %427 = vmatprep.subr.mxu0 0.0
        %428 = vmatpush1.msra.mxu0 0.0
        %429 = vmatprep.subr.mxu0 0.0
        %430 = vmatpush1.msra.mxu0 0.0
        %431 = vmatprep.subr.mxu0 0.0
        %432 = vmatpush1.msra.mxu0 0.0
        %433 = vmatprep.subr.mxu0 0.0
        %434 = vmatpush1.msra.mxu0 0.0
        %435 = vmatprep.subr.mxu0 0.0
        %436 = vmatpush1.msra.mxu0 0.0
        %437 = vmatprep.subr.mxu0 0.0
        %438 = vmatpush1.msra.mxu0 0.0
        %439 = vmatprep.subr.mxu0 0.0
        %440 = vmatpush1.msra.mxu0 0.0
        %441 = vmatprep.subr.mxu0 0.0
        %442 = vmatpush1.msra.mxu0 0.0
        %443 = vmatprep.subr.mxu0 0.0
        %444 = vmatpush1.msra.mxu0 0.0
        %445 = vmatprep.subr.mxu0 0.0
        %446 = vmatpush1.msra.mxu0 0.0
        %447 = vmatprep.subr.mxu0 0.0
        %448 = vmatpush1.msra.mxu0 0.0
        %449 = vmatprep.subr.mxu0 0.0
        %450 = vmatpush1.msra.mxu0 0.0
        %451 = vmatprep.subr.mxu0 0.0
        %452 = vmatpush1.msra.mxu0 0.0
        %453 = vmatprep.subr.mxu0 0.0
        %454 = vmatpush1.msra.mxu0 0.0
        %455 = vmatprep.subr.mxu0 0.0
        %456 = vmatpush1.msra.mxu0 0.0
        %457 = vmatprep.subr.mxu0 0.0
        %458 = vmatpush1.msra.mxu0 0.0
        %459 = vmatprep.mubr.f32.mxu0 0.0
        %460 = vmatmul.mubr.f32.gmra.mrb[0].mxu0 %v393
        %v461 = vpop.f32.mrb[0].mxu0
        %v462 = vadd.f32 0.0, %v461
        %v463 = vpop.f32.mrb[0].mxu0
        %v464 = vadd.f32 0.0, %v463
        %465 = vdwg.mxu0
        %v466 = vld [vmem:[%s319] sm:$0xff]
        %v468 = vcombine.high %v466, %v466
        %v472 = vrot.slane %v462, 4
        %v473 = vrot.slane %v464, 4
        %vm476 = vcmask 1043456
        %v477 = vsel %vm476, %v466, %v472
        %v478 = vsel %vm476, %v468, %v473
        %479 = vrot.lane.b32.xlu0 %v477, 17
        %v480 = vpop.permute.xlu0 %479
        %481 = vrot.lane.b32.xlu0 %v478, 17
        %v482 = vpop.permute.xlu0 %481
        %v483 = vlaneseq
        %v484 = vand.u32 %v483, 127
        %vm485 = vcmp.lt.s32.totalorder %v484, 17
        %v486 = vsel %vm485, %v480, %v482
        %v487 = vsel %vm485, %v482, %v480
        %v488 = vlaneseq
        %v489 = vshrl.u32 %v488, 7
        %v490 = vsub.s32 0, %v489
        %v491 = vrot.slane %v370, %v490
        %v492 = vlaneseq
        %v493 = vshrl.u32 %v492, 7
        %v494 = vsub.s32 0, %v493
        %v495 = vrot.slane %v371, %v494
        %v496 = vmul.f32 %v487, %v491
        %v497 = vmul.f32 %v486, %v495
        %498 = vst [vmem:[#allocation2] sm:$0xff] %v496
        %499 = vst [vmem:[#allocation2 + $0x8] sm:$0xff] %v497
        %500 = vrot.lane.b32.xlu0 %v477, 16
        %v501 = vpop.permute.xlu0 %500
        %502 = vrot.lane.b32.xlu0 %v478, 16
        %v503 = vpop.permute.xlu0 %502
        %vm504 = vcmp.lt.s32.totalorder %v484, 16
        %v505 = vsel %vm504, %v501, %v503
        %v506 = vsel %vm504, %v503, %v501
        %v507 = vlaneseq
        %v508 = vshrl.u32 %v507, 7
        %v509 = vsub.s32 1, %v508
        %v510 = vrot.slane %v370, %v509
        %v511 = vlaneseq
        %v512 = vshrl.u32 %v511, 7
        %v513 = vsub.s32 1, %v512
        %v514 = vrot.slane %v371, %v513
        %v515 = vmul.f32 %v506, %v510
        %v516 = vmul.f32 %v505, %v514
        %517 = vst [vmem:[#allocation2 + $0x10] sm:$0xff] %v515
        %518 = vst [vmem:[#allocation2 + $0x18] sm:$0xff] %v516
        %519 = vrot.lane.b32.xlu0 %v477, 15
        %v520 = vpop.permute.xlu0 %519
        %521 = vrot.lane.b32.xlu0 %v478, 15
        %v522 = vpop.permute.xlu0 %521
        %vm523 = vcmp.lt.s32.totalorder %v484, 15
        %v524 = vsel %vm523, %v520, %v522
        %v525 = vsel %vm523, %v522, %v520
        %v526 = vlaneseq
        %v527 = vshrl.u32 %v526, 7
        %v528 = vsub.s32 2, %v527
        %v529 = vrot.slane %v370, %v528
        %v530 = vlaneseq
        %v531 = vshrl.u32 %v530, 7
        %v532 = vsub.s32 2, %v531
        %v533 = vrot.slane %v371, %v532
        %v534 = vmul.f32 %v525, %v529
        %v535 = vmul.f32 %v524, %v533
        %536 = vst [vmem:[#allocation2 + $0x20] sm:$0xff] %v534
        %537 = vst [vmem:[#allocation2 + $0x28] sm:$0xff] %v535
        %538 = vrot.lane.b32.xlu0 %v477, 1
        %v539 = vpop.permute.xlu0 %538
        %540 = vrot.lane.b32.xlu0 %v478, 1
        %v541 = vpop.permute.xlu0 %540
        %vm542 = vcmp.lt.s32.totalorder %v484, 1
        %v543 = vsel %vm542, %v539, %v541
        %v544 = vsel %vm542, %v541, %v539
        %v545 = vlaneseq
        %v546 = vshrl.u32 %v545, 7
        %v547 = vsub.s32 3, %v546
        %v548 = vrot.slane %v370, %v547
        %v549 = vlaneseq
        %v550 = vshrl.u32 %v549, 7
        %v551 = vsub.s32 3, %v550
        %v552 = vrot.slane %v371, %v551
        %v553 = vmul.f32 %v544, %v548
        %v554 = vmul.f32 %v543, %v552
        %555 = vst [vmem:[#allocation2 + $0x30] sm:$0xff] %v553
        %556 = vst [vmem:[#allocation2 + $0x38] sm:$0xff] %v554
        %557 = vst [vmem:[#allocation2 + $0x40] sm:$0xff] %v477
        %558 = vst [vmem:[#allocation2 + $0x48] sm:$0xff] %v478
        %559 = vrot.lane.b32.xlu0 %v477, 127
        %v560 = vpop.permute.xlu0 %559
        %561 = vrot.lane.b32.xlu0 %v478, 127
        %v562 = vpop.permute.xlu0 %561
        %vm563 = vcmp.lt.s32.totalorder %v484, 127
        %v564 = vsel %vm563, %v560, %v562
        %v565 = vsel %vm563, %v562, %v560
        %v566 = vlaneseq
        %v567 = vshrl.u32 %v566, 7
        %v568 = vsub.s32 5, %v567
        %v569 = vrot.slane %v370, %v568
        %v570 = vlaneseq
        %v571 = vshrl.u32 %v570, 7
        %v572 = vsub.s32 5, %v571
        %v573 = vrot.slane %v371, %v572
        %v574 = vmul.f32 %v564, %v569
        %v575 = vmul.f32 %v565, %v573
        %576 = vst [vmem:[#allocation2 + $0x50] sm:$0xff] %v574
        %577 = vst [vmem:[#allocation2 + $0x58] sm:$0xff] %v575
        %578 = vrot.lane.b32.xlu0 %v477, 113
        %v579 = vpop.permute.xlu0 %578
        %580 = vrot.lane.b32.xlu0 %v478, 113
        %v581 = vpop.permute.xlu0 %580
        %vm582 = vcmp.lt.s32.totalorder %v484, 113
        %v583 = vsel %vm582, %v579, %v581
        %v584 = vsel %vm582, %v581, %v579
        %v585 = vlaneseq
        %v586 = vshrl.u32 %v585, 7
        %v587 = vsub.s32 6, %v586
        %v588 = vrot.slane %v370, %v587
        %v589 = vlaneseq
        %v590 = vshrl.u32 %v589, 7
        %v591 = vsub.s32 6, %v590
        %v592 = vrot.slane %v371, %v591
        %v593 = vmul.f32 %v583, %v588
        %v594 = vmul.f32 %v584, %v592
        %595 = vst [vmem:[#allocation2 + $0x60] sm:$0xff] %v593
        %596 = vst [vmem:[#allocation2 + $0x68] sm:$0xff] %v594
        %597 = vrot.lane.b32.xlu0 %v477, 112
        %v598 = vpop.permute.xlu0 %597
        %599 = vrot.lane.b32.xlu0 %v478, 112
        %v600 = vpop.permute.xlu0 %599
        %vm601 = vcmp.lt.s32.totalorder %v484, 112
        %v602 = vsel %vm601, %v598, %v600
        %v603 = vsel %vm601, %v600, %v598
        %v604 = vlaneseq
        %v605 = vshrl.u32 %v604, 7
        %v606 = vsub.s32 7, %v605
        %v607 = vrot.slane %v370, %v606
        %v608 = vlaneseq
        %v609 = vshrl.u32 %v608, 7
        %v610 = vsub.s32 7, %v609
        %v611 = vrot.slane %v371, %v610
        %v612 = vmul.f32 %v602, %v607
        %v613 = vmul.f32 %v603, %v611
        %614 = vst [vmem:[#allocation2 + $0x70] sm:$0xff] %v612
        %615 = vst [vmem:[#allocation2 + $0x78] sm:$0xff] %v613
        %616 = vrot.lane.b32.xlu0 %v477, 111
        %v617 = vpop.permute.xlu0 %616
        %618 = vrot.lane.b32.xlu0 %v478, 111
        %v619 = vpop.permute.xlu0 %618
        %vm620 = vcmp.lt.s32.totalorder %v484, 111
        %v621 = vsel %vm620, %v617, %v619
        %v622 = vsel %vm620, %v619, %v617
        %v623 = vlaneseq
        %v624 = vshrl.u32 %v623, 7
        %v625 = vsub.s32 0, %v624
        %v626 = vrot.slane %v372, %v625
        %v627 = vlaneseq
        %v628 = vshrl.u32 %v627, 7
        %v629 = vsub.s32 0, %v628
        %v630 = vrot.slane %v373, %v629
        %v631 = vmul.f32 %v621, %v626
        %v632 = vmul.f32 %v622, %v630
        %633 = vst [vmem:[#allocation2 + $0x80] sm:$0xff] %v631
        %634 = vst [vmem:[#allocation2 + $0x88] sm:$0xff] %v632
        %v635 = vld [vmem:[%s4] sm:$0xf]
        %v636 = vld [vmem:[#allocation2] sm:$0xff]
        %v637 = vld [vmem:[#allocation2 + $0x8] sm:$0xff]
        %v638 = vld [vmem:[#allocation2 + $0x10] sm:$0xff]
        %v639 = vld [vmem:[#allocation2 + $0x18] sm:$0xff]
        %v640 = vld [vmem:[#allocation2 + $0x20] sm:$0xff]
        %v641 = vld [vmem:[#allocation2 + $0x28] sm:$0xff]
        %v642 = vld [vmem:[#allocation2 + $0x30] sm:$0xff]
        %v643 = vld [vmem:[#allocation2 + $0x38] sm:$0xff]
        %v644 = vld [vmem:[#allocation2 + $0x40] sm:$0xff]
        %v645 = vld [vmem:[#allocation2 + $0x48] sm:$0xff]
        %v646 = vld [vmem:[#allocation2 + $0x50] sm:$0xff]
        %v647 = vld [vmem:[#allocation2 + $0x58] sm:$0xff]
        %v648 = vld [vmem:[#allocation2 + $0x60] sm:$0xff]
        %v649 = vld [vmem:[#allocation2 + $0x68] sm:$0xff]
        %v650 = vld [vmem:[#allocation2 + $0x70] sm:$0xff]
        %v651 = vld [vmem:[#allocation2 + $0x78] sm:$0xff]
        %v652 = vld [vmem:[#allocation2 + $0x80] sm:$0xff]
        %v653 = vld [vmem:[#allocation2 + $0x88] sm:$0xff]
        %v654 = vld [vmem:[%s6] sm:$0xf]
        %656 = vset.pattern.permute.xlu0 0
        %657 = vperm.xlu0 %656, %v654
        %v658 = vpop.permute.xlu0 %657
        %vm660 = vcmask 588800
        %v662 = vsel %vm660, %v635, 0
        %664 = vmatprep.subr.mxu0 %v637
        %665 = vmatpush1.msra.mxu0 %v636
        %666 = vmatprep.subr.mxu0 %v639
        %667 = vmatpush1.msra.mxu0 %v638
        %668 = vmatprep.subr.mxu0 %v641
        %669 = vmatpush1.msra.mxu0 %v640
        %670 = vmatprep.subr.mxu0 %v643
        %671 = vmatpush1.msra.mxu0 %v642
        %672 = vmatprep.subr.mxu0 %v645
        %673 = vmatpush1.msra.mxu0 %v644
        %674 = vmatprep.subr.mxu0 %v647
        %675 = vmatpush1.msra.mxu0 %v646
        %676 = vmatprep.subr.mxu0 %v649
        %677 = vmatpush1.msra.mxu0 %v648
        %678 = vmatprep.subr.mxu0 %v651
        %679 = vmatpush1.msra.mxu0 %v650
        %680 = vmatprep.subr.mxu0 %v653
        %681 = vmatpush1.msra.mxu0 %v652
        %682 = vmatprep.subr.mxu0 0.0
        %683 = vmatpush1.msra.mxu0 0.0
        %684 = vmatprep.subr.mxu0 0.0
        %685 = vmatpush1.msra.mxu0 0.0
        %686 = vmatprep.subr.mxu0 0.0
        %687 = vmatpush1.msra.mxu0 0.0
        %688 = vmatprep.subr.mxu0 0.0
        %689 = vmatpush1.msra.mxu0 0.0
        %690 = vmatprep.subr.mxu0 0.0
        %691 = vmatpush1.msra.mxu0 0.0
        %692 = vmatprep.subr.mxu0 0.0
        %693 = vmatpush1.msra.mxu0 0.0
        %694 = vmatprep.subr.mxu0 0.0
        %695 = vmatpush1.msra.mxu0 0.0
        %696 = vmatprep.subr.mxu0 0.0
        %697 = vmatpush1.msra.mxu0 0.0
        %698 = vmatprep.subr.mxu0 0.0
        %699 = vmatpush1.msra.mxu0 0.0
        %700 = vmatprep.subr.mxu0 0.0
        %701 = vmatpush1.msra.mxu0 0.0
        %702 = vmatprep.subr.mxu0 0.0
        %703 = vmatpush1.msra.mxu0 0.0
        %704 = vmatprep.subr.mxu0 0.0
        %705 = vmatpush1.msra.mxu0 0.0
        %706 = vmatprep.subr.mxu0 0.0
        %707 = vmatpush1.msra.mxu0 0.0
        %708 = vmatprep.subr.mxu0 0.0
        %709 = vmatpush1.msra.mxu0 0.0
        %710 = vmatprep.subr.mxu0 0.0
        %711 = vmatpush1.msra.mxu0 0.0
        %712 = vmatprep.subr.mxu0 0.0
        %713 = vmatpush1.msra.mxu0 0.0
        %714 = vmatprep.subr.mxu0 0.0
        %715 = vmatpush1.msra.mxu0 0.0
        %716 = vmatprep.subr.mxu0 0.0
        %717 = vmatpush1.msra.mxu0 0.0
        %718 = vmatprep.subr.mxu0 0.0
        %719 = vmatpush1.msra.mxu0 0.0
        %720 = vmatprep.subr.mxu0 0.0
        %721 = vmatpush1.msra.mxu0 0.0
        %722 = vmatprep.subr.mxu0 0.0
        %723 = vmatpush1.msra.mxu0 0.0
        %724 = vmatprep.subr.mxu0 0.0
        %725 = vmatpush1.msra.mxu0 0.0
        %726 = vmatprep.subr.mxu0 0.0
        %727 = vmatpush1.msra.mxu0 0.0
        %728 = vmatprep.mubr.f32.mxu0 0.0
        %729 = vmatmul.mubr.f32.gmra.mrb[0].mxu0 %v662
        %v730 = vpop.f32.mrb[0].mxu0
        %v731 = vadd.f32 %v658, %v730
        %v732 = vpop.f32.mrb[0].mxu0
        %v733 = vadd.f32 %v658, %v732
        %734 = vdwg.mxu0
        %v735 = vmax.f32 %v731, 0.0
        %v736 = vmax.f32 %v733, 0.0
        %737 = vrot.lane.b32.xlu0 %v735, 17
        %v738 = vpop.permute.xlu0 %737
        %739 = vrot.lane.b32.xlu0 %v736, 17
        %v740 = vpop.permute.xlu0 %739
        %v741 = vsel %vm485, %v738, %v740
        %v742 = vsel %vm485, %v740, %v738
        %v743 = vmul.f32 %v742, %v491
        %v744 = vmul.f32 %v741, %v495
        %745 = vst [vmem:[#allocation2] sm:$0xf] %v743
        %746 = vst [vmem:[#allocation2 + $0x8] sm:$0xf] %v744
        %747 = vrot.lane.b32.xlu0 %v735, 16
        %v748 = vpop.permute.xlu0 %747
        %749 = vrot.lane.b32.xlu0 %v736, 16
        %v750 = vpop.permute.xlu0 %749
        %v751 = vsel %vm504, %v748, %v750
        %v752 = vsel %vm504, %v750, %v748
        %v753 = vmul.f32 %v752, %v510
        %v754 = vmul.f32 %v751, %v514
        %v757 = vrot.slane %v753, 4
        %v758 = vrot.slane %v754, 4
        %761 = vst [vmem:[#allocation2] sm:$0xf0] %v757
        %762 = vst [vmem:[#allocation2 + $0x8] sm:$0xf0] %v758
        %763 = vrot.lane.b32.xlu0 %v735, 15
        %v764 = vpop.permute.xlu0 %763
        %765 = vrot.lane.b32.xlu0 %v736, 15
        %v766 = vpop.permute.xlu0 %765
        %v767 = vsel %vm523, %v764, %v766
        %v768 = vsel %vm523, %v766, %v764
        %v769 = vmul.f32 %v768, %v529
        %v770 = vmul.f32 %v767, %v533
        %771 = vst [vmem:[#allocation2 + $0x10] sm:$0xf] %v769
        %772 = vst [vmem:[#allocation2 + $0x18] sm:$0xf] %v770
        %773 = vrot.lane.b32.xlu0 %v735, 1
        %v774 = vpop.permute.xlu0 %773
        %775 = vrot.lane.b32.xlu0 %v736, 1
        %v776 = vpop.permute.xlu0 %775
        %v777 = vsel %vm542, %v774, %v776
        %v778 = vsel %vm542, %v776, %v774
        %v779 = vmul.f32 %v778, %v548
        %v780 = vmul.f32 %v777, %v552
        %v783 = vrot.slane %v779, 4
        %v784 = vrot.slane %v780, 4
        %787 = vst [vmem:[#allocation2 + $0x10] sm:$0xf0] %v783
        %788 = vst [vmem:[#allocation2 + $0x18] sm:$0xf0] %v784
        %789 = vst [vmem:[#allocation2 + $0x20] sm:$0xf] %v735
        %790 = vst [vmem:[#allocation2 + $0x28] sm:$0xf] %v736
        %791 = vrot.lane.b32.xlu0 %v735, 127
        %v792 = vpop.permute.xlu0 %791
        %793 = vrot.lane.b32.xlu0 %v736, 127
        %v794 = vpop.permute.xlu0 %793
        %v795 = vsel %vm563, %v792, %v794
        %v796 = vsel %vm563, %v794, %v792
        %v797 = vmul.f32 %v795, %v569
        %v798 = vmul.f32 %v796, %v573
        %v801 = vrot.slane %v797, 4
        %v802 = vrot.slane %v798, 4
        %805 = vst [vmem:[#allocation2 + $0x20] sm:$0xf0] %v801
        %806 = vst [vmem:[#allocation2 + $0x28] sm:$0xf0] %v802
        %807 = vrot.lane.b32.xlu0 %v735, 113
        %v808 = vpop.permute.xlu0 %807
        %809 = vrot.lane.b32.xlu0 %v736, 113
        %v810 = vpop.permute.xlu0 %809
        %v811 = vsel %vm582, %v808, %v810
        %v812 = vsel %vm582, %v810, %v808
        %v813 = vmul.f32 %v811, %v588
        %v814 = vmul.f32 %v812, %v592
        %815 = vst [vmem:[#allocation2 + $0x30] sm:$0xf] %v813
        %816 = vst [vmem:[#allocation2 + $0x38] sm:$0xf] %v814
        %817 = vrot.lane.b32.xlu0 %v735, 112
        %v818 = vpop.permute.xlu0 %817
        %819 = vrot.lane.b32.xlu0 %v736, 112
        %v820 = vpop.permute.xlu0 %819
        %v821 = vsel %vm601, %v818, %v820
        %v822 = vsel %vm601, %v820, %v818
        %v823 = vmul.f32 %v821, %v607
        %v824 = vmul.f32 %v822, %v611
        %v827 = vrot.slane %v823, 4
        %v828 = vrot.slane %v824, 4
        %831 = vst [vmem:[#allocation2 + $0x30] sm:$0xf0] %v827
        %832 = vst [vmem:[#allocation2 + $0x38] sm:$0xf0] %v828
        %833 = vrot.lane.b32.xlu0 %v735, 111
        %v834 = vpop.permute.xlu0 %833
        %835 = vrot.lane.b32.xlu0 %v736, 111
        %v836 = vpop.permute.xlu0 %835
        %v837 = vsel %vm620, %v834, %v836
        %v838 = vsel %vm620, %v836, %v834
        %v839 = vmul.f32 %v837, %v626
        %v840 = vmul.f32 %v838, %v630
        %841 = vst [vmem:[#allocation2 + $0x40] sm:$0xf] %v839
        %842 = vst [vmem:[#allocation2 + $0x48] sm:$0xf] %v840
        %v843 = vld [vmem:[%s5] sm:$0xf]
        %v844 = vld [vmem:[#allocation2] sm:$0xff]
        %v845 = vld [vmem:[#allocation2 + $0x8] sm:$0xff]
        %v846 = vld [vmem:[#allocation2 + $0x10] sm:$0xff]
        %v847 = vld [vmem:[#allocation2 + $0x18] sm:$0xff]
        %v848 = vld [vmem:[#allocation2 + $0x20] sm:$0xff]
        %v849 = vld [vmem:[#allocation2 + $0x28] sm:$0xff]
        %v850 = vld [vmem:[#allocation2 + $0x30] sm:$0xff]
        %v851 = vld [vmem:[#allocation2 + $0x38] sm:$0xff]
        %v852 = vld [vmem:[#allocation2 + $0x40] sm:$0xf]
        %v853 = vld [vmem:[#allocation2 + $0x48] sm:$0xf]
        %v854 = vld [vmem:[%s7] sm:$0xf]
        %856 = vset.pattern.permute.xlu0 0
        %857 = vperm.xlu0 %856, %v854
        %v858 = vpop.permute.xlu0 %857
        %vm860 = vcmask 293888
        %v862 = vsel %vm860, %v843, 0
        %v865 = vsel %vm476, %v852, 0
        %v868 = vsel %vm476, %v853, 0
        %870 = vmatprep.subr.mxu0 %v845
        %871 = vmatpush1.msra.mxu0 %v844
        %872 = vmatprep.subr.mxu0 %v847
        %873 = vmatpush1.msra.mxu0 %v846
        %874 = vmatprep.subr.mxu0 %v849
        %875 = vmatpush1.msra.mxu0 %v848
        %876 = vmatprep.subr.mxu0 %v851
        %877 = vmatpush1.msra.mxu0 %v850
        %878 = vmatprep.subr.mxu0 %v868
        %879 = vmatpush1.msra.mxu0 %v865
        %880 = vmatprep.subr.mxu0 0.0
        %881 = vmatpush1.msra.mxu0 0.0
        %882 = vmatprep.subr.mxu0 0.0
        %883 = vmatpush1.msra.mxu0 0.0
        %884 = vmatprep.subr.mxu0 0.0
        %885 = vmatpush1.msra.mxu0 0.0
        %886 = vmatprep.subr.mxu0 0.0
        %887 = vmatpush1.msra.mxu0 0.0
        %888 = vmatprep.subr.mxu0 0.0
        %889 = vmatpush1.msra.mxu0 0.0
        %890 = vmatprep.subr.mxu0 0.0
        %891 = vmatpush1.msra.mxu0 0.0
        %892 = vmatprep.subr.mxu0 0.0
        %893 = vmatpush1.msra.mxu0 0.0
        %894 = vmatprep.subr.mxu0 0.0
        %895 = vmatpush1.msra.mxu0 0.0
        %896 = vmatprep.subr.mxu0 0.0
        %897 = vmatpush1.msra.mxu0 0.0
        %898 = vmatprep.subr.mxu0 0.0
        %899 = vmatpush1.msra.mxu0 0.0
        %900 = vmatprep.subr.mxu0 0.0
        %901 = vmatpush1.msra.mxu0 0.0
        %902 = vmatprep.subr.mxu0 0.0
        %903 = vmatpush1.msra.mxu0 0.0
        %904 = vmatprep.subr.mxu0 0.0
        %905 = vmatpush1.msra.mxu0 0.0
        %906 = vmatprep.subr.mxu0 0.0
        %907 = vmatpush1.msra.mxu0 0.0
        %908 = vmatprep.subr.mxu0 0.0
        %909 = vmatpush1.msra.mxu0 0.0
        %910 = vmatprep.subr.mxu0 0.0
        %911 = vmatpush1.msra.mxu0 0.0
        %912 = vmatprep.subr.mxu0 0.0
        %913 = vmatpush1.msra.mxu0 0.0
        %914 = vmatprep.subr.mxu0 0.0
        %915 = vmatpush1.msra.mxu0 0.0
        %916 = vmatprep.subr.mxu0 0.0
        %917 = vmatpush1.msra.mxu0 0.0
        %918 = vmatprep.subr.mxu0 0.0
        %919 = vmatpush1.msra.mxu0 0.0
        %920 = vmatprep.subr.mxu0 0.0
        %921 = vmatpush1.msra.mxu0 0.0
        %922 = vmatprep.subr.mxu0 0.0
        %923 = vmatpush1.msra.mxu0 0.0
        %924 = vmatprep.subr.mxu0 0.0
        %925 = vmatpush1.msra.mxu0 0.0
        %926 = vmatprep.subr.mxu0 0.0
        %927 = vmatpush1.msra.mxu0 0.0
        %928 = vmatprep.subr.mxu0 0.0
        %929 = vmatpush1.msra.mxu0 0.0
        %930 = vmatprep.subr.mxu0 0.0
        %931 = vmatpush1.msra.mxu0 0.0
        %932 = vmatprep.subr.mxu0 0.0
        %933 = vmatpush1.msra.mxu0 0.0
        %934 = vmatprep.mubr.f32.mxu0 0.0
        %935 = vmatmul.mubr.f32.gmra.mrb[0].mxu0 %v862
        %v936 = vpop.f32.mrb[0].mxu0
        %v937 = vadd.f32 %v858, %v936
        %v938 = vpop.f32.mrb[0].mxu0
        %v939 = vadd.f32 %v858, %v938
        %940 = vdwg.mxu0
        %v941 = vmax.f32 %v937, 0.0
        %v942 = vmax.f32 %v939, 0.0
        %v945 = vcombine.low %v941, %v942
        %947 = vst [vmem:[%s363] sm:$0xff] %v945
        %s948 = sand.u32 %s212, 1
        %s949 = scalar_lea.sflag [#allocation5], %s948
        %s950 = sand.u32 %s212, 1
        %s951 = smul.addr %s950, 8
        %s952 = scalar_lea.vmem [#allocation9], %s951
        // Predicated region
        $region65: #{tpu_custom_call.1} parent=51 // pred_check
          %p953 = pneg %p222
        $region66: #{tpu_custom_call.1} parent=51 // pred_check_branch
          %955 = sbr.rel (%p953) target = $region68
        $region67: #{tpu_custom_call.1} parent=51 // pred_region
          %s956 = smul.u32 2, %s26
          %s958 = ssub.s32 128, 128
          %959 = vsyncadd %s949, %s958
          %s960 = smul.addr %s956, 64
          %s961 = scalar_lea.hbm %s8, %s960
          %s963 = sshll.u32 %s952, 4
          %s964 = int_to_ptr.vmem [resolvable:$true] %s963
          %966 = dma.vmem_to_hbm [thread:$0]  %s964, 128, %s961, %s949
        $region68: #{tpu_custom_call.1} parent=51 // pred_fallthru
          _
      $region52: #{tpu_custom_call.1} parent=5 // pred_fallthru
        _
      %p967 = scmp.le.s32.totalorder 2, %s21
      // Predicated region
      $region69: #{tpu_custom_call.1} parent=5 // pred_check
        %p968 = pneg %p967
      $region70: #{tpu_custom_call.1} parent=5 // pred_check_branch
        %970 = sbr.rel (%p968) target = $region72
      $region71: #{tpu_custom_call.1} parent=5 // pred_region
        %s971 = ssub.s32 %s21, 2
        // Predicated region
        $region73: #{tpu_custom_call.1} parent=71 // pred_check
          %p972 = pneg %p228
        $region74: #{tpu_custom_call.1} parent=71 // pred_check_branch
          %974 = sbr.rel (%p972) target = $region76
        $region75: #{tpu_custom_call.1} parent=71 // pred_region
          %s975 = sand.u32 %s213, 1
          %s976 = scalar_lea.sflag [#allocation5], %s975
          %s977 = sand.u32 %s213, 1
          %s978 = smul.addr %s977, 8
          %s979 = scalar_lea.vmem [#allocation9], %s978
          %980 = dma.done %s976, 128
        $region76: #{tpu_custom_call.1} parent=71 // pred_fallthru
          _
      $region72: #{tpu_custom_call.1} parent=5 // pred_fallthru
        _
    $region6: #{tpu_custom_call.1} parent=1 // loop_footer
      %s25 = sadd.s32 1, %s21
    $region7: #{tpu_custom_call.1} parent=1 // loop_footer_branch
      %20 = sbr.rel target = $region3
    $region8: #{tpu_custom_call.1} parent=1 // loop_exit
      _
    %981 = vsyncpa [#allocation4], 1
    %s982 = scalar_lea.sflag [#allocation4], 1
    %983 = vsyncpa %s982, 1
    %984 = vsyncpa [#allocation7], 1
    %985 = vsyncpa [#allocation5], 1
    %s986 = scalar_lea.sflag [#allocation5], 1
    %987 = vsyncpa %s986, 1

</llo_original>
